<compile_context>
chip_gen: v7x
topology: tpu7x:2x2x1
jax: 0.10.0
libtpu: 0.0.40
codegen_flags: <defaults>
</compile_context>

<pallas_src>
import functools

import jax
import jax.numpy as jnp
import numpy as np
from jax.experimental import pallas as pl
from jax.experimental.pallas import tpu as pltpu


def _lstm_recurrence_kernel(xg_ref, wh_ref, h0_ref, c0_ref,
                            hseq_ref, hfin_ref, cfin_ref,
                            h_sc, c_sc, *, hidden_size, block_t):
    """One grid step == `block_t` timesteps. h/c carried in VMEM scratch.

    xg_ref:   (block_t, B, 4H)  precomputed x_t @ W_x + b          (f32)
    wh_ref:   (H, 4H)           recurrent gate weights (resident)
    hseq_ref: (1, B, block_t*H) lane-dense packed hidden sequence
    hfin/cfin:(B, H)            final states, written on last step only
    """
    tb = pl.program_id(0)
    H = hidden_size

    @pl.when(tb == 0)
    def _():
        h_sc[...] = h0_ref[...]
        c_sc[...] = c0_ref[...]

    h = h_sc[...]
    c = c_sc[...]

    # Fully-unrolled inner time loop (block_t is a static compile-time
    # constant, so this is the same codegen as lax.fori_loop(..., unroll=True)
    # while keeping every slice/store offset static).
    for tt in range(block_t):
        # Recurrent gate matmul on the MXU: (B, H) @ (H, 4H), f32 accumulation.
        gates = jnp.dot(h.astype(wh_ref.dtype), wh_ref[...],
                        preferred_element_type=jnp.float32) + xg_ref[tt]
        # Gate order along the 4H axis: [f, i, o, c].
        # NOTE: at production H (>=128) pre-pack so each gate slice is
        # lane-aligned; at H=32 the unaligned-slice cost is negligible.
        f_t = jax.nn.sigmoid(gates[:, 0 * H:1 * H])
        i_t = jax.nn.sigmoid(gates[:, 1 * H:2 * H])
        o_t = jax.nn.sigmoid(gates[:, 2 * H:3 * H])
        c_hat = jnp.tanh(gates[:, 3 * H:4 * H])
        c = f_t * c + i_t * c_hat
        h = o_t * jnp.tanh(c)
        # Pack h_t at lane offset tt*H of the (B, block_t*H) output block so
        # the block's HBM writeback DMA is fully lane-dense.
        hseq_ref[0, :, tt * H:(tt + 1) * H] = h.astype(hseq_ref.dtype)

    # Carry the state to the next time block.
    h_sc[...] = h
    c_sc[...] = c

    # Final states: resident (constant-index) outputs, written once at the end.
    @pl.when(tb == pl.num_programs(0) - 1)
    def _():
        hfin_ref[...] = h.astype(hfin_ref.dtype)
        cfin_ref[...] = c.astype(cfin_ref.dtype)


def _pick_time_block(T, max_block=32):
    """Largest divisor of T not exceeding max_block (falls back to T)."""
    best = 1
    for d in range(1, T + 1):
        if T % d == 0 and d <= max_block:
            best = d
    return best


def custom_lstm_forward(x, params, init_states=None, *,
                        matmul_dtype=jnp.bfloat16, block_t=None):
    """x: (B, T, I) float32 (PyTorch batch-major). Returns (output, (h_T, c_T)).

    matmul_dtype: dtype for weights / matmul inputs (bf16 recommended; f32
    accumulation and f32 state/activation math are used regardless).
    """
    x = jnp.asarray(x, jnp.float32)
    B, T, I = x.shape
    H = params["Wf"].shape[0]
    O = params["Wfc"].shape[0]

    if block_t is None:
        block_t = _pick_time_block(T)
    if T % block_t != 0:
        raise ValueError(f"block_t={block_t} must divide T={T}")
    num_blocks = T // block_t

    # ---- Pack gate weights (order [f, i, o, c] along the 4H axis). --------
    W = jnp.concatenate([params["Wf"], params["Wi"],
                         params["Wo"], params["Wc"]], axis=0)          # (4H, H+I)
    b = jnp.concatenate([params["bf"], params["bi"],
                         params["bo"], params["bc"]], axis=0)          # (4H,)
    W_h = W[:, :H].T.astype(matmul_dtype)                              # (H, 4H)
    W_x = W[:, H:].T.astype(matmul_dtype)                              # (I, 4H)

    # ---- Hoisted input projection: one large (T*B, I) @ (I, 4H) matmul. ---
    x_tm = jnp.transpose(x, (1, 0, 2))                                 # (T, B, I)
    xg = (jnp.dot(x_tm.reshape(T * B, I).astype(matmul_dtype), W_x,
                  preferred_element_type=jnp.float32)
          + b.astype(jnp.float32)).reshape(T, B, 4 * H)                # (T, B, 4H)

    if init_states is None:
        h0 = jnp.zeros((B, H), jnp.float32)
        c0 = jnp.zeros((B, H), jnp.float32)
    else:
        h0, c0 = init_states
        h0 = jnp.asarray(h0, jnp.float32)
        c0 = jnp.asarray(c0, jnp.float32)

    kernel = functools.partial(_lstm_recurrence_kernel,
                               hidden_size=H, block_t=block_t)

    hseq_packed, h_final, c_final = pl.pallas_call(
        kernel,
        out_shape=(
            jax.ShapeDtypeStruct((num_blocks, B, block_t * H), matmul_dtype),
            jax.ShapeDtypeStruct((B, H), jnp.float32),
            jax.ShapeDtypeStruct((B, H), jnp.float32),
        ),
        grid_spec=pltpu.PrefetchScalarGridSpec(
            num_scalar_prefetch=0,
            grid=(num_blocks,),
            in_specs=[
                pl.BlockSpec((block_t, B, 4 * H), lambda tb: (tb, 0, 0)),  # x-gates
                pl.BlockSpec((H, 4 * H), lambda tb: (0, 0)),               # W_h (resident)
                pl.BlockSpec((B, H), lambda tb: (0, 0)),                   # h0
                pl.BlockSpec((B, H), lambda tb: (0, 0)),                   # c0
            ],
            out_specs=[
                pl.BlockSpec((1, B, block_t * H), lambda tb: (tb, 0, 0)),  # hseq (lane-dense)
                pl.BlockSpec((B, H), lambda tb: (0, 0)),                   # h_T (resident)
                pl.BlockSpec((B, H), lambda tb: (0, 0)),                   # c_T (resident)
            ],
            scratch_shapes=[
                pltpu.VMEM((B, H), jnp.float32),   # h carry
                pltpu.VMEM((B, H), jnp.float32),   # c carry
            ],
        ),
        # Time is a true recurrence -> "arbitrary" (sequential).
        # For production-size H: raise vmem_limit_bytes (v6e) or tile the 4H
        # axis / keep bf16 weights (v7x, 64 MiB VMEM); at these shapes the
        # defaults are fine. On v7x with B >= 16, add a leading "parallel"
        # batch grid axis to shard across the two TensorCores.
        compiler_params=pltpu.CompilerParams(
            dimension_semantics=("arbitrary",)),
    )(xg, W_h, h0, c0)

    # ---- Unpack lane-dense hseq back to time-major (T, B, H). -------------
    hseq_tm = (hseq_packed.reshape(num_blocks, B, block_t, H)
               .transpose(0, 2, 1, 3).reshape(T, B, H))

    # ---- Hoisted FC head: one large (T*B, H) @ (H, O) matmul. -------------
    Wfc_t = params["Wfc"].T.astype(matmul_dtype)                       # (H, O)
    logits = (jnp.dot(hseq_tm.reshape(T * B, H).astype(matmul_dtype), Wfc_t,
                      preferred_element_type=jnp.float32)
              + params["bfc"].astype(jnp.float32)).reshape(T, B, O)
    output = jnp.transpose(logits, (1, 0, 2))                          # (B, T, O)
    return output, (h_final, c_final)


def _lstm_reference(x, params):
    """Pure-JAX f32 reference of the intended LSTM semantics (validation)."""
    Wf, Wi, Wo, Wc = params["Wf"], params["Wi"], params["Wo"], params["Wc"]
    bf, bi, bo, bc = params["bf"], params["bi"], params["bo"], params["bc"]
    Wfc, bfc = params["Wfc"], params["bfc"]
    B, T, _ = x.shape
    H = Wf.shape[0]
    h = jnp.zeros((B, H), jnp.float32)
    c = jnp.zeros((B, H), jnp.float32)
    hs = []
    for t in range(T):
        comb = jnp.concatenate([h, x[:, t, :]], axis=1)
        f = jax.nn.sigmoid(comb @ Wf.T + bf)
        i = jax.nn.sigmoid(comb @ Wi.T + bi)
        o = jax.nn.sigmoid(comb @ Wo.T + bo)
        ch = jnp.tanh(comb @ Wc.T + bc)
        c = f * c + i * ch
        h = o * jnp.tanh(c)
        hs.append(h)
    hseq = jnp.stack(hs, axis=1)
    out = hseq @ Wfc.T + bfc
    return out, (h, c)


if __name__ == "__main__":
    # Small shapes consistent with the module (vocab-sized input/output).
    B, T, I, H, O = 8, 16, 32, 32, 32

    key = jax.random.PRNGKey(0)
    ks = jax.random.split(key, 8)
    # Deterministic init mirroring CustomLSTM.__init__ shapes
    # (torch.randn for gate weights, zeros for gate biases, small fc init).
    params = {
        "Wf": jax.random.normal(ks[0], (H, H + I), jnp.float32),
        "Wi": jax.random.normal(ks[1], (H, H + I), jnp.float32),
        "Wo": jax.random.normal(ks[2], (H, H + I), jnp.float32),
        "Wc": jax.random.normal(ks[3], (H, H + I), jnp.float32),
        "bf": jnp.zeros((H,), jnp.float32),
        "bi": jnp.zeros((H,), jnp.float32),
        "bo": jnp.zeros((H,), jnp.float32),
        "bc": jnp.zeros((H,), jnp.float32),
        "Wfc": jax.random.normal(ks[4], (O, H), jnp.float32) * 0.1,
        "bfc": jax.random.normal(ks[5], (O,), jnp.float32) * 0.1,
    }
    x = jax.random.normal(ks[6], (B, T, I), jnp.float32)

    out_ref, (h_ref, c_ref) = _lstm_reference(x, params)

    # 1) f32 path (exact semantics) with 2 time blocks: tight validation of
    #    the kernel math and the cross-block state carry.
    out32, (h32, c32) = custom_lstm_forward(x, params,
                                            matmul_dtype=jnp.float32, block_t=8)
    jax.block_until_ready((out32, h32, c32))
    np.testing.assert_allclose(np.asarray(out32), np.asarray(out_ref),
                               rtol=1e-3, atol=2e-3)
    np.testing.assert_allclose(np.asarray(h32), np.asarray(h_ref),
                               rtol=1e-3, atol=2e-3)
    np.testing.assert_allclose(np.asarray(c32), np.asarray(c_ref),
                               rtol=1e-3, atol=2e-3)

    # 2) bf16 weights / matmul inputs (recommended production setting): f32
    #    accumulation and f32 state carry, so only weight/activation rounding
    #    differs from the f32 reference -> coarse sanity tolerance.
    outbf, (hbf, cbf) = custom_lstm_forward(x, params,
                                            matmul_dtype=jnp.bfloat16, block_t=8)
    jax.block_until_ready((outbf, hbf, cbf))
    np.testing.assert_allclose(np.asarray(outbf), np.asarray(out_ref),
                               rtol=2e-1, atol=5e-1)
    np.testing.assert_allclose(np.asarray(hbf), np.asarray(h_ref),
                               rtol=2e-1, atol=5e-1)
    np.testing.assert_allclose(np.asarray(cbf), np.asarray(c_ref),
                               rtol=2e-1, atol=5e-1)

    print("KERNEL_OK")
</pallas_src>

<mosaic_0001>
module attributes {stable_mosaic.version = 11 : i64} {
  func.func @_lstm_recurrence_kernel(%arg0: i32, %arg1: memref<8x8x128xf32, #tpu.memory_space<vmem>>, %arg2: memref<32x128xf32, #tpu.memory_space<vmem>>, %arg3: memref<8x32xf32, #tpu.memory_space<vmem>>, %arg4: memref<8x32xf32, #tpu.memory_space<vmem>>, %arg5: memref<1x8x256xf32, #tpu.memory_space<vmem>>, %arg6: memref<8x32xf32, #tpu.memory_space<vmem>>, %arg7: memref<8x32xf32, #tpu.memory_space<vmem>>, %arg8: memref<8x32xf32, #tpu.memory_space<vmem>>, %arg9: memref<8x32xf32, #tpu.memory_space<vmem>>) attributes {dimension_semantics = [#tpu.dimension_semantics<arbitrary>], iteration_bounds = array<i64: 2>, scalar_prefetch = 0 : i64, scratch_operands = 2 : i64, tpu.core_type = #tpu.core_type<tc>, window_params = [{transform_indices = @transform_0, window_bounds = array<i64: 8, 8, 128>}, {pipeline_mode = #tpu.pipeline_mode<synchronous>, transform_indices = @transform_1, window_bounds = array<i64: 32, 128>}, {pipeline_mode = #tpu.pipeline_mode<synchronous>, transform_indices = @transform_2, window_bounds = array<i64: 8, 32>}, {pipeline_mode = #tpu.pipeline_mode<synchronous>, transform_indices = @transform_3, window_bounds = array<i64: 8, 32>}, {transform_indices = @transform_4, window_bounds = array<i64: 1, 8, 256>}, {pipeline_mode = #tpu.pipeline_mode<synchronous>, transform_indices = @transform_5, window_bounds = array<i64: 8, 32>}, {pipeline_mode = #tpu.pipeline_mode<synchronous>, transform_indices = @transform_6, window_bounds = array<i64: 8, 32>}]} {
    %c0_i32 = arith.constant 0 : i32
    %0 = arith.cmpi eq, %arg0, %c0_i32 : i32
    %1 = arith.extui %0 : i1 to i32
    %c0_i32_0 = arith.constant 0 : i32
    %2 = arith.cmpi ne, %1, %c0_i32_0 : i32
    scf.if %2 {
      %c0_90 = arith.constant 0 : index
      %c0_91 = arith.constant 0 : index
      %274 = vector.load %arg3[%c0_90, %c0_91] : memref<8x32xf32, #tpu.memory_space<vmem>>, vector<8x32xf32>
      %c0_92 = arith.constant 0 : index
      %c0_93 = arith.constant 0 : index
      %275 = vector.load %arg8[%c0_92, %c0_93] : memref<8x32xf32, #tpu.memory_space<vmem>>, vector<8x32xf32>
      tpu.vector_store %arg8[%c0_92, %c0_93], %274 {strides = array<i32>} : memref<8x32xf32, #tpu.memory_space<vmem>>, vector<8x32xf32>,
      %c0_94 = arith.constant 0 : index
      %c0_95 = arith.constant 0 : index
      %276 = vector.load %arg4[%c0_94, %c0_95] : memref<8x32xf32, #tpu.memory_space<vmem>>, vector<8x32xf32>
      %c0_96 = arith.constant 0 : index
      %c0_97 = arith.constant 0 : index
      %277 = vector.load %arg9[%c0_96, %c0_97] : memref<8x32xf32, #tpu.memory_space<vmem>>, vector<8x32xf32>
      tpu.vector_store %arg9[%c0_96, %c0_97], %276 {strides = array<i32>} : memref<8x32xf32, #tpu.memory_space<vmem>>, vector<8x32xf32>,
    } else {
    }
    %c0 = arith.constant 0 : index
    %c0_1 = arith.constant 0 : index
    %3 = vector.load %arg8[%c0, %c0_1] : memref<8x32xf32, #tpu.memory_space<vmem>>, vector<8x32xf32>
    %c0_2 = arith.constant 0 : index
    %c0_3 = arith.constant 0 : index
    %4 = vector.load %arg9[%c0_2, %c0_3] : memref<8x32xf32, #tpu.memory_space<vmem>>, vector<8x32xf32>
    %c0_4 = arith.constant 0 : index
    %c0_5 = arith.constant 0 : index
    %5 = vector.load %arg2[%c0_4, %c0_5] : memref<32x128xf32, #tpu.memory_space<vmem>>, vector<32x128xf32>
    %cst = arith.constant dense<0.000000e+00> : vector<8x128xf32>
    %6 = tpu.matmul %3, %5, %cst {dimension_numbers = #tpu.dot_dimension_numbers<[1], [0], [0], [1], [0, 0, 1, 1], [], []>} : vector<8x32xf32>, vector<32x128xf32>, vector<8x128xf32> -> vector<8x128xf32>
    %c0_6 = arith.constant 0 : index
    %c0_7 = arith.constant 0 : index
    %c0_8 = arith.constant 0 : index
    %7 = vector.load %arg1[%c0_6, %c0_7, %c0_8] : memref<8x8x128xf32, #tpu.memory_space<vmem>>, vector<1x8x128xf32>
    %8 = vector.shape_cast %7 : vector<1x8x128xf32> to vector<8x128xf32>
    %9 = arith.addf %6, %8 : vector<8x128xf32>
    %10 = vector.extract_strided_slice %9 {offsets = [0, 0], sizes = [8, 32], strides = [1, 1]} : vector<8x128xf32> to vector<8x32xf32>
    %11 = arith.negf %10 : vector<8x32xf32>
    %12 = math.exp %11 : vector<8x32xf32>
    %cst_9 = arith.constant 1.000000e+00 : f32
    %13 = vector.broadcast %cst_9 : f32 to vector<8x32xf32>
    %14 = arith.addf %13, %12 : vector<8x32xf32>
    %15 = arith.divf %13, %14 : vector<8x32xf32>
    %16 = vector.extract_strided_slice %9 {offsets = [0, 32], sizes = [8, 32], strides = [1, 1]} : vector<8x128xf32> to vector<8x32xf32>
    %17 = arith.negf %16 : vector<8x32xf32>
    %18 = math.exp %17 : vector<8x32xf32>
    %cst_10 = arith.constant 1.000000e+00 : f32
    %19 = vector.broadcast %cst_10 : f32 to vector<8x32xf32>
    %20 = arith.addf %19, %18 : vector<8x32xf32>
    %21 = arith.divf %19, %20 : vector<8x32xf32>
    %22 = vector.extract_strided_slice %9 {offsets = [0, 64], sizes = [8, 32], strides = [1, 1]} : vector<8x128xf32> to vector<8x32xf32>
    %23 = arith.negf %22 : vector<8x32xf32>
    %24 = math.exp %23 : vector<8x32xf32>
    %cst_11 = arith.constant 1.000000e+00 : f32
    %25 = vector.broadcast %cst_11 : f32 to vector<8x32xf32>
    %26 = arith.addf %25, %24 : vector<8x32xf32>
    %27 = arith.divf %25, %26 : vector<8x32xf32>
    %28 = vector.extract_strided_slice %9 {offsets = [0, 96], sizes = [8, 32], strides = [1, 1]} : vector<8x128xf32> to vector<8x32xf32>
    %29 = math.tanh %28 : vector<8x32xf32>
    %30 = arith.mulf %15, %4 : vector<8x32xf32>
    %31 = arith.mulf %21, %29 : vector<8x32xf32>
    %32 = arith.addf %30, %31 : vector<8x32xf32>
    %33 = math.tanh %32 : vector<8x32xf32>
    %34 = arith.mulf %27, %33 : vector<8x32xf32>
    %c0_12 = arith.constant 0 : index
    %c0_13 = arith.constant 0 : index
    %c0_14 = arith.constant 0 : index
    %35 = vector.load %arg5[%c0_12, %c0_13, %c0_14] : memref<1x8x256xf32, #tpu.memory_space<vmem>>, vector<1x8x32xf32>
    %36 = vector.shape_cast %35 : vector<1x8x32xf32> to vector<8x32xf32>
    %37 = vector.shape_cast %34 : vector<8x32xf32> to vector<1x8x32xf32>
    tpu.vector_store %arg5[%c0_12, %c0_13, %c0_14], %37 {strides = array<i32>} : memref<1x8x256xf32, #tpu.memory_space<vmem>>, vector<1x8x32xf32>,
    %c0_15 = arith.constant 0 : index
    %c0_16 = arith.constant 0 : index
    %38 = vector.load %arg2[%c0_15, %c0_16] : memref<32x128xf32, #tpu.memory_space<vmem>>, vector<32x128xf32>
    %cst_17 = arith.constant dense<0.000000e+00> : vector<8x128xf32>
    %39 = tpu.matmul %34, %38, %cst_17 {dimension_numbers = #tpu.dot_dimension_numbers<[1], [0], [0], [1], [0, 0, 1, 1], [], []>} : vector<8x32xf32>, vector<32x128xf32>, vector<8x128xf32> -> vector<8x128xf32>
    %c1 = arith.constant 1 : index
    %c0_18 = arith.constant 0 : index
    %c0_19 = arith.constant 0 : index
    %40 = vector.load %arg1[%c1, %c0_18, %c0_19] : memref<8x8x128xf32, #tpu.memory_space<vmem>>, vector<1x8x128xf32>
    %41 = vector.shape_cast %40 : vector<1x8x128xf32> to vector<8x128xf32>
    %42 = arith.addf %39, %41 : vector<8x128xf32>
    %43 = vector.extract_strided_slice %42 {offsets = [0, 0], sizes = [8, 32], strides = [1, 1]} : vector<8x128xf32> to vector<8x32xf32>
    %44 = arith.negf %43 : vector<8x32xf32>
    %45 = math.exp %44 : vector<8x32xf32>
    %cst_20 = arith.constant 1.000000e+00 : f32
    %46 = vector.broadcast %cst_20 : f32 to vector<8x32xf32>
    %47 = arith.addf %46, %45 : vector<8x32xf32>
    %48 = arith.divf %46, %47 : vector<8x32xf32>
    %49 = vector.extract_strided_slice %42 {offsets = [0, 32], sizes = [8, 32], strides = [1, 1]} : vector<8x128xf32> to vector<8x32xf32>
    %50 = arith.negf %49 : vector<8x32xf32>
    %51 = math.exp %50 : vector<8x32xf32>
    %cst_21 = arith.constant 1.000000e+00 : f32
    %52 = vector.broadcast %cst_21 : f32 to vector<8x32xf32>
    %53 = arith.addf %52, %51 : vector<8x32xf32>
    %54 = arith.divf %52, %53 : vector<8x32xf32>
    %55 = vector.extract_strided_slice %42 {offsets = [0, 64], sizes = [8, 32], strides = [1, 1]} : vector<8x128xf32> to vector<8x32xf32>
    %56 = arith.negf %55 : vector<8x32xf32>
    %57 = math.exp %56 : vector<8x32xf32>
    %cst_22 = arith.constant 1.000000e+00 : f32
    %58 = vector.broadcast %cst_22 : f32 to vector<8x32xf32>
    %59 = arith.addf %58, %57 : vector<8x32xf32>
    %60 = arith.divf %58, %59 : vector<8x32xf32>
    %61 = vector.extract_strided_slice %42 {offsets = [0, 96], sizes = [8, 32], strides = [1, 1]} : vector<8x128xf32> to vector<8x32xf32>
    %62 = math.tanh %61 : vector<8x32xf32>
    %63 = arith.mulf %48, %32 : vector<8x32xf32>
    %64 = arith.mulf %54, %62 : vector<8x32xf32>
    %65 = arith.addf %63, %64 : vector<8x32xf32>
    %66 = math.tanh %65 : vector<8x32xf32>
    %67 = arith.mulf %60, %66 : vector<8x32xf32>
    %c0_23 = arith.constant 0 : index
    %c0_24 = arith.constant 0 : index
    %c32 = arith.constant 32 : index
    %68 = vector.load %arg5[%c0_23, %c0_24, %c32] : memref<1x8x256xf32, #tpu.memory_space<vmem>>, vector<1x8x32xf32>
    %69 = vector.shape_cast %68 : vector<1x8x32xf32> to vector<8x32xf32>
    %70 = vector.shape_cast %67 : vector<8x32xf32> to vector<1x8x32xf32>
    tpu.vector_store %arg5[%c0_23, %c0_24, %c32], %70 {strides = array<i32>} : memref<1x8x256xf32, #tpu.memory_space<vmem>>, vector<1x8x32xf32>,
    %c0_25 = arith.constant 0 : index
    %c0_26 = arith.constant 0 : index
    %71 = vector.load %arg2[%c0_25, %c0_26] : memref<32x128xf32, #tpu.memory_space<vmem>>, vector<32x128xf32>
    %cst_27 = arith.constant dense<0.000000e+00> : vector<8x128xf32>
    %72 = tpu.matmul %67, %71, %cst_27 {dimension_numbers = #tpu.dot_dimension_numbers<[1], [0], [0], [1], [0, 0, 1, 1], [], []>} : vector<8x32xf32>, vector<32x128xf32>, vector<8x128xf32> -> vector<8x128xf32>
    %c2 = arith.constant 2 : index
    %c0_28 = arith.constant 0 : index
    %c0_29 = arith.constant 0 : index
    %73 = vector.load %arg1[%c2, %c0_28, %c0_29] : memref<8x8x128xf32, #tpu.memory_space<vmem>>, vector<1x8x128xf32>
    %74 = vector.shape_cast %73 : vector<1x8x128xf32> to vector<8x128xf32>
    %75 = arith.addf %72, %74 : vector<8x128xf32>
    %76 = vector.extract_strided_slice %75 {offsets = [0, 0], sizes = [8, 32], strides = [1, 1]} : vector<8x128xf32> to vector<8x32xf32>
    %77 = arith.negf %76 : vector<8x32xf32>
    %78 = math.exp %77 : vector<8x32xf32>
    %cst_30 = arith.constant 1.000000e+00 : f32
    %79 = vector.broadcast %cst_30 : f32 to vector<8x32xf32>
    %80 = arith.addf %79, %78 : vector<8x32xf32>
    %81 = arith.divf %79, %80 : vector<8x32xf32>
    %82 = vector.extract_strided_slice %75 {offsets = [0, 32], sizes = [8, 32], strides = [1, 1]} : vector<8x128xf32> to vector<8x32xf32>
    %83 = arith.negf %82 : vector<8x32xf32>
    %84 = math.exp %83 : vector<8x32xf32>
    %cst_31 = arith.constant 1.000000e+00 : f32
    %85 = vector.broadcast %cst_31 : f32 to vector<8x32xf32>
    %86 = arith.addf %85, %84 : vector<8x32xf32>
    %87 = arith.divf %85, %86 : vector<8x32xf32>
    %88 = vector.extract_strided_slice %75 {offsets = [0, 64], sizes = [8, 32], strides = [1, 1]} : vector<8x128xf32> to vector<8x32xf32>
    %89 = arith.negf %88 : vector<8x32xf32>
    %90 = math.exp %89 : vector<8x32xf32>
    %cst_32 = arith.constant 1.000000e+00 : f32
    %91 = vector.broadcast %cst_32 : f32 to vector<8x32xf32>
    %92 = arith.addf %91, %90 : vector<8x32xf32>
    %93 = arith.divf %91, %92 : vector<8x32xf32>
    %94 = vector.extract_strided_slice %75 {offsets = [0, 96], sizes = [8, 32], strides = [1, 1]} : vector<8x128xf32> to vector<8x32xf32>
    %95 = math.tanh %94 : vector<8x32xf32>
    %96 = arith.mulf %81, %65 : vector<8x32xf32>
    %97 = arith.mulf %87, %95 : vector<8x32xf32>
    %98 = arith.addf %96, %97 : vector<8x32xf32>
    %99 = math.tanh %98 : vector<8x32xf32>
    %100 = arith.mulf %93, %99 : vector<8x32xf32>
    %c0_33 = arith.constant 0 : index
    %c0_34 = arith.constant 0 : index
    %c64 = arith.constant 64 : index
    %101 = vector.load %arg5[%c0_33, %c0_34, %c64] : memref<1x8x256xf32, #tpu.memory_space<vmem>>, vector<1x8x32xf32>
    %102 = vector.shape_cast %101 : vector<1x8x32xf32> to vector<8x32xf32>
    %103 = vector.shape_cast %100 : vector<8x32xf32> to vector<1x8x32xf32>
    tpu.vector_store %arg5[%c0_33, %c0_34, %c64], %103 {strides = array<i32>} : memref<1x8x256xf32, #tpu.memory_space<vmem>>, vector<1x8x32xf32>,
    %c0_35 = arith.constant 0 : index
    %c0_36 = arith.constant 0 : index
    %104 = vector.load %arg2[%c0_35, %c0_36] : memref<32x128xf32, #tpu.memory_space<vmem>>, vector<32x128xf32>
    %cst_37 = arith.constant dense<0.000000e+00> : vector<8x128xf32>
    %105 = tpu.matmul %100, %104, %cst_37 {dimension_numbers = #tpu.dot_dimension_numbers<[1], [0], [0], [1], [0, 0, 1, 1], [], []>} : vector<8x32xf32>, vector<32x128xf32>, vector<8x128xf32> -> vector<8x128xf32>
    %c3 = arith.constant 3 : index
    %c0_38 = arith.constant 0 : index
    %c0_39 = arith.constant 0 : index
    %106 = vector.load %arg1[%c3, %c0_38, %c0_39] : memref<8x8x128xf32, #tpu.memory_space<vmem>>, vector<1x8x128xf32>
    %107 = vector.shape_cast %106 : vector<1x8x128xf32> to vector<8x128xf32>
    %108 = arith.addf %105, %107 : vector<8x128xf32>
    %109 = vector.extract_strided_slice %108 {offsets = [0, 0], sizes = [8, 32], strides = [1, 1]} : vector<8x128xf32> to vector<8x32xf32>
    %110 = arith.negf %109 : vector<8x32xf32>
    %111 = math.exp %110 : vector<8x32xf32>
    %cst_40 = arith.constant 1.000000e+00 : f32
    %112 = vector.broadcast %cst_40 : f32 to vector<8x32xf32>
    %113 = arith.addf %112, %111 : vector<8x32xf32>
    %114 = arith.divf %112, %113 : vector<8x32xf32>
    %115 = vector.extract_strided_slice %108 {offsets = [0, 32], sizes = [8, 32], strides = [1, 1]} : vector<8x128xf32> to vector<8x32xf32>
    %116 = arith.negf %115 : vector<8x32xf32>
    %117 = math.exp %116 : vector<8x32xf32>
    %cst_41 = arith.constant 1.000000e+00 : f32
    %118 = vector.broadcast %cst_41 : f32 to vector<8x32xf32>
    %119 = arith.addf %118, %117 : vector<8x32xf32>
    %120 = arith.divf %118, %119 : vector<8x32xf32>
    %121 = vector.extract_strided_slice %108 {offsets = [0, 64], sizes = [8, 32], strides = [1, 1]} : vector<8x128xf32> to vector<8x32xf32>
    %122 = arith.negf %121 : vector<8x32xf32>
    %123 = math.exp %122 : vector<8x32xf32>
    %cst_42 = arith.constant 1.000000e+00 : f32
    %124 = vector.broadcast %cst_42 : f32 to vector<8x32xf32>
    %125 = arith.addf %124, %123 : vector<8x32xf32>
    %126 = arith.divf %124, %125 : vector<8x32xf32>
    %127 = vector.extract_strided_slice %108 {offsets = [0, 96], sizes = [8, 32], strides = [1, 1]} : vector<8x128xf32> to vector<8x32xf32>
    %128 = math.tanh %127 : vector<8x32xf32>
    %129 = arith.mulf %114, %98 : vector<8x32xf32>
    %130 = arith.mulf %120, %128 : vector<8x32xf32>
    %131 = arith.addf %129, %130 : vector<8x32xf32>
    %132 = math.tanh %131 : vector<8x32xf32>
    %133 = arith.mulf %126, %132 : vector<8x32xf32>
    %c0_43 = arith.constant 0 : index
    %c0_44 = arith.constant 0 : index
    %c96 = arith.constant 96 : index
    %134 = vector.load %arg5[%c0_43, %c0_44, %c96] : memref<1x8x256xf32, #tpu.memory_space<vmem>>, vector<1x8x32xf32>
    %135 = vector.shape_cast %134 : vector<1x8x32xf32> to vector<8x32xf32>
    %136 = vector.shape_cast %133 : vector<8x32xf32> to vector<1x8x32xf32>
    tpu.vector_store %arg5[%c0_43, %c0_44, %c96], %136 {strides = array<i32>} : memref<1x8x256xf32, #tpu.memory_space<vmem>>, vector<1x8x32xf32>,
    %c0_45 = arith.constant 0 : index
    %c0_46 = arith.constant 0 : index
    %137 = vector.load %arg2[%c0_45, %c0_46] : memref<32x128xf32, #tpu.memory_space<vmem>>, vector<32x128xf32>
    %cst_47 = arith.constant dense<0.000000e+00> : vector<8x128xf32>
    %138 = tpu.matmul %133, %137, %cst_47 {dimension_numbers = #tpu.dot_dimension_numbers<[1], [0], [0], [1], [0, 0, 1, 1], [], []>} : vector<8x32xf32>, vector<32x128xf32>, vector<8x128xf32> -> vector<8x128xf32>
    %c4 = arith.constant 4 : index
    %c0_48 = arith.constant 0 : index
    %c0_49 = arith.constant 0 : index
    %139 = vector.load %arg1[%c4, %c0_48, %c0_49] : memref<8x8x128xf32, #tpu.memory_space<vmem>>, vector<1x8x128xf32>
    %140 = vector.shape_cast %139 : vector<1x8x128xf32> to vector<8x128xf32>
    %141 = arith.addf %138, %140 : vector<8x128xf32>
    %142 = vector.extract_strided_slice %141 {offsets = [0, 0], sizes = [8, 32], strides = [1, 1]} : vector<8x128xf32> to vector<8x32xf32>
    %143 = arith.negf %142 : vector<8x32xf32>
    %144 = math.exp %143 : vector<8x32xf32>
    %cst_50 = arith.constant 1.000000e+00 : f32
    %145 = vector.broadcast %cst_50 : f32 to vector<8x32xf32>
    %146 = arith.addf %145, %144 : vector<8x32xf32>
    %147 = arith.divf %145, %146 : vector<8x32xf32>
    %148 = vector.extract_strided_slice %141 {offsets = [0, 32], sizes = [8, 32], strides = [1, 1]} : vector<8x128xf32> to vector<8x32xf32>
    %149 = arith.negf %148 : vector<8x32xf32>
    %150 = math.exp %149 : vector<8x32xf32>
    %cst_51 = arith.constant 1.000000e+00 : f32
    %151 = vector.broadcast %cst_51 : f32 to vector<8x32xf32>
    %152 = arith.addf %151, %150 : vector<8x32xf32>
    %153 = arith.divf %151, %152 : vector<8x32xf32>
    %154 = vector.extract_strided_slice %141 {offsets = [0, 64], sizes = [8, 32], strides = [1, 1]} : vector<8x128xf32> to vector<8x32xf32>
    %155 = arith.negf %154 : vector<8x32xf32>
    %156 = math.exp %155 : vector<8x32xf32>
    %cst_52 = arith.constant 1.000000e+00 : f32
    %157 = vector.broadcast %cst_52 : f32 to vector<8x32xf32>
    %158 = arith.addf %157, %156 : vector<8x32xf32>
    %159 = arith.divf %157, %158 : vector<8x32xf32>
    %160 = vector.extract_strided_slice %141 {offsets = [0, 96], sizes = [8, 32], strides = [1, 1]} : vector<8x128xf32> to vector<8x32xf32>
    %161 = math.tanh %160 : vector<8x32xf32>
    %162 = arith.mulf %147, %131 : vector<8x32xf32>
    %163 = arith.mulf %153, %161 : vector<8x32xf32>
    %164 = arith.addf %162, %163 : vector<8x32xf32>
    %165 = math.tanh %164 : vector<8x32xf32>
    %166 = arith.mulf %159, %165 : vector<8x32xf32>
    %c0_53 = arith.constant 0 : index
    %c0_54 = arith.constant 0 : index
    %c128 = arith.constant 128 : index
    %167 = vector.load %arg5[%c0_53, %c0_54, %c128] : memref<1x8x256xf32, #tpu.memory_space<vmem>>, vector<1x8x32xf32>
    %168 = vector.shape_cast %167 : vector<1x8x32xf32> to vector<8x32xf32>
    %169 = vector.shape_cast %166 : vector<8x32xf32> to vector<1x8x32xf32>
    tpu.vector_store %arg5[%c0_53, %c0_54, %c128], %169 {strides = array<i32>} : memref<1x8x256xf32, #tpu.memory_space<vmem>>, vector<1x8x32xf32>,
    %c0_55 = arith.constant 0 : index
    %c0_56 = arith.constant 0 : index
    %170 = vector.load %arg2[%c0_55, %c0_56] : memref<32x128xf32, #tpu.memory_space<vmem>>, vector<32x128xf32>
    %cst_57 = arith.constant dense<0.000000e+00> : vector<8x128xf32>
    %171 = tpu.matmul %166, %170, %cst_57 {dimension_numbers = #tpu.dot_dimension_numbers<[1], [0], [0], [1], [0, 0, 1, 1], [], []>} : vector<8x32xf32>, vector<32x128xf32>, vector<8x128xf32> -> vector<8x128xf32>
    %c5 = arith.constant 5 : index
    %c0_58 = arith.constant 0 : index
    %c0_59 = arith.constant 0 : index
    %172 = vector.load %arg1[%c5, %c0_58, %c0_59] : memref<8x8x128xf32, #tpu.memory_space<vmem>>, vector<1x8x128xf32>
    %173 = vector.shape_cast %172 : vector<1x8x128xf32> to vector<8x128xf32>
    %174 = arith.addf %171, %173 : vector<8x128xf32>
    %175 = vector.extract_strided_slice %174 {offsets = [0, 0], sizes = [8, 32], strides = [1, 1]} : vector<8x128xf32> to vector<8x32xf32>
    %176 = arith.negf %175 : vector<8x32xf32>
    %177 = math.exp %176 : vector<8x32xf32>
    %cst_60 = arith.constant 1.000000e+00 : f32
    %178 = vector.broadcast %cst_60 : f32 to vector<8x32xf32>
    %179 = arith.addf %178, %177 : vector<8x32xf32>
    %180 = arith.divf %178, %179 : vector<8x32xf32>
    %181 = vector.extract_strided_slice %174 {offsets = [0, 32], sizes = [8, 32], strides = [1, 1]} : vector<8x128xf32> to vector<8x32xf32>
    %182 = arith.negf %181 : vector<8x32xf32>
    %183 = math.exp %182 : vector<8x32xf32>
    %cst_61 = arith.constant 1.000000e+00 : f32
    %184 = vector.broadcast %cst_61 : f32 to vector<8x32xf32>
    %185 = arith.addf %184, %183 : vector<8x32xf32>
    %186 = arith.divf %184, %185 : vector<8x32xf32>
    %187 = vector.extract_strided_slice %174 {offsets = [0, 64], sizes = [8, 32], strides = [1, 1]} : vector<8x128xf32> to vector<8x32xf32>
    %188 = arith.negf %187 : vector<8x32xf32>
    %189 = math.exp %188 : vector<8x32xf32>
    %cst_62 = arith.constant 1.000000e+00 : f32
    %190 = vector.broadcast %cst_62 : f32 to vector<8x32xf32>
    %191 = arith.addf %190, %189 : vector<8x32xf32>
    %192 = arith.divf %190, %191 : vector<8x32xf32>
    %193 = vector.extract_strided_slice %174 {offsets = [0, 96], sizes = [8, 32], strides = [1, 1]} : vector<8x128xf32> to vector<8x32xf32>
    %194 = math.tanh %193 : vector<8x32xf32>
    %195 = arith.mulf %180, %164 : vector<8x32xf32>
    %196 = arith.mulf %186, %194 : vector<8x32xf32>
    %197 = arith.addf %195, %196 : vector<8x32xf32>
    %198 = math.tanh %197 : vector<8x32xf32>
    %199 = arith.mulf %192, %198 : vector<8x32xf32>
    %c0_63 = arith.constant 0 : index
    %c0_64 = arith.constant 0 : index
    %c160 = arith.constant 160 : index
    %200 = vector.load %arg5[%c0_63, %c0_64, %c160] : memref<1x8x256xf32, #tpu.memory_space<vmem>>, vector<1x8x32xf32>
    %201 = vector.shape_cast %200 : vector<1x8x32xf32> to vector<8x32xf32>
    %202 = vector.shape_cast %199 : vector<8x32xf32> to vector<1x8x32xf32>
    tpu.vector_store %arg5[%c0_63, %c0_64, %c160], %202 {strides = array<i32>} : memref<1x8x256xf32, #tpu.memory_space<vmem>>, vector<1x8x32xf32>,
    %c0_65 = arith.constant 0 : index
    %c0_66 = arith.constant 0 : index
    %203 = vector.load %arg2[%c0_65, %c0_66] : memref<32x128xf32, #tpu.memory_space<vmem>>, vector<32x128xf32>
    %cst_67 = arith.constant dense<0.000000e+00> : vector<8x128xf32>
    %204 = tpu.matmul %199, %203, %cst_67 {dimension_numbers = #tpu.dot_dimension_numbers<[1], [0], [0], [1], [0, 0, 1, 1], [], []>} : vector<8x32xf32>, vector<32x128xf32>, vector<8x128xf32> -> vector<8x128xf32>
    %c6 = arith.constant 6 : index
    %c0_68 = arith.constant 0 : index
    %c0_69 = arith.constant 0 : index
    %205 = vector.load %arg1[%c6, %c0_68, %c0_69] : memref<8x8x128xf32, #tpu.memory_space<vmem>>, vector<1x8x128xf32>
    %206 = vector.shape_cast %205 : vector<1x8x128xf32> to vector<8x128xf32>
    %207 = arith.addf %204, %206 : vector<8x128xf32>
    %208 = vector.extract_strided_slice %207 {offsets = [0, 0], sizes = [8, 32], strides = [1, 1]} : vector<8x128xf32> to vector<8x32xf32>
    %209 = arith.negf %208 : vector<8x32xf32>
    %210 = math.exp %209 : vector<8x32xf32>
    %cst_70 = arith.constant 1.000000e+00 : f32
    %211 = vector.broadcast %cst_70 : f32 to vector<8x32xf32>
    %212 = arith.addf %211, %210 : vector<8x32xf32>
    %213 = arith.divf %211, %212 : vector<8x32xf32>
    %214 = vector.extract_strided_slice %207 {offsets = [0, 32], sizes = [8, 32], strides = [1, 1]} : vector<8x128xf32> to vector<8x32xf32>
    %215 = arith.negf %214 : vector<8x32xf32>
    %216 = math.exp %215 : vector<8x32xf32>
    %cst_71 = arith.constant 1.000000e+00 : f32
    %217 = vector.broadcast %cst_71 : f32 to vector<8x32xf32>
    %218 = arith.addf %217, %216 : vector<8x32xf32>
    %219 = arith.divf %217, %218 : vector<8x32xf32>
    %220 = vector.extract_strided_slice %207 {offsets = [0, 64], sizes = [8, 32], strides = [1, 1]} : vector<8x128xf32> to vector<8x32xf32>
    %221 = arith.negf %220 : vector<8x32xf32>
    %222 = math.exp %221 : vector<8x32xf32>
    %cst_72 = arith.constant 1.000000e+00 : f32
    %223 = vector.broadcast %cst_72 : f32 to vector<8x32xf32>
    %224 = arith.addf %223, %222 : vector<8x32xf32>
    %225 = arith.divf %223, %224 : vector<8x32xf32>
    %226 = vector.extract_strided_slice %207 {offsets = [0, 96], sizes = [8, 32], strides = [1, 1]} : vector<8x128xf32> to vector<8x32xf32>
    %227 = math.tanh %226 : vector<8x32xf32>
    %228 = arith.mulf %213, %197 : vector<8x32xf32>
    %229 = arith.mulf %219, %227 : vector<8x32xf32>
    %230 = arith.addf %228, %229 : vector<8x32xf32>
    %231 = math.tanh %230 : vector<8x32xf32>
    %232 = arith.mulf %225, %231 : vector<8x32xf32>
    %c0_73 = arith.constant 0 : index
    %c0_74 = arith.constant 0 : index
    %c192 = arith.constant 192 : index
    %233 = vector.load %arg5[%c0_73, %c0_74, %c192] : memref<1x8x256xf32, #tpu.memory_space<vmem>>, vector<1x8x32xf32>
    %234 = vector.shape_cast %233 : vector<1x8x32xf32> to vector<8x32xf32>
    %235 = vector.shape_cast %232 : vector<8x32xf32> to vector<1x8x32xf32>
    tpu.vector_store %arg5[%c0_73, %c0_74, %c192], %235 {strides = array<i32>} : memref<1x8x256xf32, #tpu.memory_space<vmem>>, vector<1x8x32xf32>,
    %c0_75 = arith.constant 0 : index
    %c0_76 = arith.constant 0 : index
    %236 = vector.load %arg2[%c0_75, %c0_76] : memref<32x128xf32, #tpu.memory_space<vmem>>, vector<32x128xf32>
    %cst_77 = arith.constant dense<0.000000e+00> : vector<8x128xf32>
    %237 = tpu.matmul %232, %236, %cst_77 {dimension_numbers = #tpu.dot_dimension_numbers<[1], [0], [0], [1], [0, 0, 1, 1], [], []>} : vector<8x32xf32>, vector<32x128xf32>, vector<8x128xf32> -> vector<8x128xf32>
    %c7 = arith.constant 7 : index
    %c0_78 = arith.constant 0 : index
    %c0_79 = arith.constant 0 : index
    %238 = vector.load %arg1[%c7, %c0_78, %c0_79] : memref<8x8x128xf32, #tpu.memory_space<vmem>>, vector<1x8x128xf32>
    %239 = vector.shape_cast %238 : vector<1x8x128xf32> to vector<8x128xf32>
    %240 = arith.addf %237, %239 : vector<8x128xf32>
    %241 = vector.extract_strided_slice %240 {offsets = [0, 0], sizes = [8, 32], strides = [1, 1]} : vector<8x128xf32> to vector<8x32xf32>
    %242 = arith.negf %241 : vector<8x32xf32>
    %243 = math.exp %242 : vector<8x32xf32>
    %cst_80 = arith.constant 1.000000e+00 : f32
    %244 = vector.broadcast %cst_80 : f32 to vector<8x32xf32>
    %245 = arith.addf %244, %243 : vector<8x32xf32>
    %246 = arith.divf %244, %245 : vector<8x32xf32>
    %247 = vector.extract_strided_slice %240 {offsets = [0, 32], sizes = [8, 32], strides = [1, 1]} : vector<8x128xf32> to vector<8x32xf32>
    %248 = arith.negf %247 : vector<8x32xf32>
    %249 = math.exp %248 : vector<8x32xf32>
    %cst_81 = arith.constant 1.000000e+00 : f32
    %250 = vector.broadcast %cst_81 : f32 to vector<8x32xf32>
    %251 = arith.addf %250, %249 : vector<8x32xf32>
    %252 = arith.divf %250, %251 : vector<8x32xf32>
    %253 = vector.extract_strided_slice %240 {offsets = [0, 64], sizes = [8, 32], strides = [1, 1]} : vector<8x128xf32> to vector<8x32xf32>
    %254 = arith.negf %253 : vector<8x32xf32>
    %255 = math.exp %254 : vector<8x32xf32>
    %cst_82 = arith.constant 1.000000e+00 : f32
    %256 = vector.broadcast %cst_82 : f32 to vector<8x32xf32>
    %257 = arith.addf %256, %255 : vector<8x32xf32>
    %258 = arith.divf %256, %257 : vector<8x32xf32>
    %259 = vector.extract_strided_slice %240 {offsets = [0, 96], sizes = [8, 32], strides = [1, 1]} : vector<8x128xf32> to vector<8x32xf32>
    %260 = math.tanh %259 : vector<8x32xf32>
    %261 = arith.mulf %246, %230 : vector<8x32xf32>
    %262 = arith.mulf %252, %260 : vector<8x32xf32>
    %263 = arith.addf %261, %262 : vector<8x32xf32>
    %264 = math.tanh %263 : vector<8x32xf32>
    %265 = arith.mulf %258, %264 : vector<8x32xf32>
    %c0_83 = arith.constant 0 : index
    %c0_84 = arith.constant 0 : index
    %c224 = arith.constant 224 : index
    %266 = vector.load %arg5[%c0_83, %c0_84, %c224] : memref<1x8x256xf32, #tpu.memory_space<vmem>>, vector<1x8x32xf32>
    %267 = vector.shape_cast %266 : vector<1x8x32xf32> to vector<8x32xf32>
    %268 = vector.shape_cast %265 : vector<8x32xf32> to vector<1x8x32xf32>
    tpu.vector_store %arg5[%c0_83, %c0_84, %c224], %268 {strides = array<i32>} : memref<1x8x256xf32, #tpu.memory_space<vmem>>, vector<1x8x32xf32>,
    %c0_85 = arith.constant 0 : index
    %c0_86 = arith.constant 0 : index
    %269 = vector.load %arg8[%c0_85, %c0_86] : memref<8x32xf32, #tpu.memory_space<vmem>>, vector<8x32xf32>
    tpu.vector_store %arg8[%c0_85, %c0_86], %265 {strides = array<i32>} : memref<8x32xf32, #tpu.memory_space<vmem>>, vector<8x32xf32>,
    %c0_87 = arith.constant 0 : index
    %c0_88 = arith.constant 0 : index
    %270 = vector.load %arg9[%c0_87, %c0_88] : memref<8x32xf32, #tpu.memory_space<vmem>>, vector<8x32xf32>
    tpu.vector_store %arg9[%c0_87, %c0_88], %263 {strides = array<i32>} : memref<8x32xf32, #tpu.memory_space<vmem>>, vector<8x32xf32>,
    %c1_i32 = arith.constant 1 : i32
    %271 = arith.cmpi eq, %arg0, %c1_i32 : i32
    %272 = arith.extui %271 : i1 to i32
    %c0_i32_89 = arith.constant 0 : i32
    %273 = arith.cmpi ne, %272, %c0_i32_89 : i32
    scf.if %273 {
      %c0_90 = arith.constant 0 : index
      %c0_91 = arith.constant 0 : index
      %274 = vector.load %arg6[%c0_90, %c0_91] : memref<8x32xf32, #tpu.memory_space<vmem>>, vector<8x32xf32>
      tpu.vector_store %arg6[%c0_90, %c0_91], %265 {strides = array<i32>} : memref<8x32xf32, #tpu.memory_space<vmem>>, vector<8x32xf32>,
      %c0_92 = arith.constant 0 : index
      %c0_93 = arith.constant 0 : index
      %275 = vector.load %arg7[%c0_92, %c0_93] : memref<8x32xf32, #tpu.memory_space<vmem>>, vector<8x32xf32>
      tpu.vector_store %arg7[%c0_92, %c0_93], %263 {strides = array<i32>} : memref<8x32xf32, #tpu.memory_space<vmem>>, vector<8x32xf32>,
    } else {
    }
    return
  }
  func.func @transform_0(%arg0: i32) -> (i32, i32, i32) {
    %c0_i32 = arith.constant 0 : i32
    %c0_i32_0 = arith.constant 0 : i32
    %c0_i32_1 = arith.constant 0 : i32
    return %arg0, %c0_i32, %c0_i32_0 : i32, i32, i32
  }
  func.func @transform_1(%arg0: i32) -> (i32, i32) {
    %c0_i32 = arith.constant 0 : i32
    %c0_i32_0 = arith.constant 0 : i32
    %c0_i32_1 = arith.constant 0 : i32
    return %c0_i32, %c0_i32_0 : i32, i32
  }
  func.func @transform_2(%arg0: i32) -> (i32, i32) {
    %c0_i32 = arith.constant 0 : i32
    %c0_i32_0 = arith.constant 0 : i32
    %c0_i32_1 = arith.constant 0 : i32
    return %c0_i32, %c0_i32_0 : i32, i32
  }
  func.func @transform_3(%arg0: i32) -> (i32, i32) {
    %c0_i32 = arith.constant 0 : i32
    %c0_i32_0 = arith.constant 0 : i32
    %c0_i32_1 = arith.constant 0 : i32
    return %c0_i32, %c0_i32_0 : i32, i32
  }
  func.func @transform_4(%arg0: i32) -> (i32, i32, i32) {
    %c0_i32 = arith.constant 0 : i32
    %c0_i32_0 = arith.constant 0 : i32
    %c0_i32_1 = arith.constant 0 : i32
    return %arg0, %c0_i32, %c0_i32_0 : i32, i32, i32
  }
  func.func @transform_5(%arg0: i32) -> (i32, i32) {
    %c0_i32 = arith.constant 0 : i32
    %c0_i32_0 = arith.constant 0 : i32
    %c0_i32_1 = arith.constant 0 : i32
    return %c0_i32, %c0_i32_0 : i32, i32
  }
  func.func @transform_6(%arg0: i32) -> (i32, i32) {
    %c0_i32 = arith.constant 0 : i32
    %c0_i32_0 = arith.constant 0 : i32
    %c0_i32_1 = arith.constant 0 : i32
    return %c0_i32, %c0_i32_0 : i32, i32
  }
}

</mosaic_0001>

<llo_original>
// kernel: tpu_custom_call.1
$region0: #{tpu_custom_call.1}
  #allocation0 [shape = 'u32[]', space=smem, size = 0x4, offset = 0x4, fixed_abs, tag = 'smem constant byte address 0x4 - core index']
  #allocation1 [shape = 'u32[144,128]{1,0:T(1,128)}', space=vmem, size = 0x12000, scoped, tag = 'internal scratch']
  #allocation2 [shape = 'f32[8,32]{1,0:T(8,128)}', space=vmem, size = 0x1000, scoped, tag = 'scratch operand']
  #allocation3 [shape = 'f32[8,32]{1,0:T(8,128)}', space=vmem, size = 0x1000, scoped, tag = 'scratch operand']
  %s0 = inlined_call_operand.hbm [shape: f32[16,8,128], index: 0, kind: input, shape index: {}]
  %s1 = inlined_call_operand.hbm [shape: f32[32,128], index: 1, kind: input, shape index: {}]
  %s2 = inlined_call_operand.hbm [shape: f32[8,32], index: 2, kind: input, shape index: {}]
  %s3 = inlined_call_operand.vmem [shape: f32[8,32], index: 3, kind: input, shape index: {}]
  %s4 = inlined_call_operand.hbm [shape: f32[2,8,256], index: 4, kind: output, shape index: {0}]
  %s5 = inlined_call_operand.hbm [shape: f32[8,32], index: 5, kind: output, shape index: {1}]
  %s6 = inlined_call_operand.hbm [shape: f32[8,32], index: 6, kind: output, shape index: {2}]
  %7 = xla_tuple %s4, %s5, %s6
  %s8 = sld [smem:[#allocation0]]
  $region85: #{tpu_custom_call.1} parent=0
    _
  %s10 = ssub.s32 1, %s8
  %s11 = scalar_select 0, %s10, %s8
  $region1: #{tpu_custom_call.1} parent=0
    #allocation4 [shape = 'u8[65536]{0}', space=vmem, size = 0x10000, scoped, tag = 'input window, operand 0']
    #allocation5 [shape = 's32[2]{0}', space=sflag, size = 0x8, scoped, tag = 'scoped memory for tpu_custom_call.1']
    #allocation6 [shape = 's32[2]{0}', space=sflag, size = 0x8, scoped, tag = 'scoped memory for tpu_custom_call.1']
    #allocation7 [shape = 'u8[16384]{0}', space=vmem, size = 0x4000, scoped, tag = 'input window, operand 1, single buffered']
    #allocation8 [shape = 's32[1]{0}', space=sflag, size = 0x4, scoped, tag = 'scoped memory for tpu_custom_call.1']
    #allocation9 [shape = 'u8[4096]{0}', space=vmem, size = 0x1000, scoped, tag = 'input window, operand 2, single buffered']
    #allocation10 [shape = 'u8[16384]{0}', space=vmem, size = 0x4000, scoped, tag = 'output window, operand 0']
    #allocation11 [shape = 'u8[4096]{0}', space=vmem, size = 0x1000, scoped, tag = 'output window, operand 1, single buffered']
    #allocation12 [shape = 's32[1]{0}', space=sflag, size = 0x4, scoped, tag = 'scoped memory for tpu_custom_call.1']
    #allocation13 [shape = 'u8[4096]{0}', space=vmem, size = 0x1000, scoped, tag = 'output window, operand 2, single buffered']
    %12 = vsyncpa [#allocation5], 0
    %s13 = scalar_lea.sflag [#allocation5], 1
    %14 = vsyncpa %s13, 0
    %15 = vsyncpa [#allocation8], 0
    %16 = vsyncpa [#allocation6], 0
    %s17 = scalar_lea.sflag [#allocation6], 1
    %18 = vsyncpa %s17, 0
    %19 = vsyncpa [#allocation12], 0
    loop: start=0, step=1, limit=4
    $region2: #{tpu_custom_call.1} parent=1 // loop_pre_header
      _
    $region3: #{tpu_custom_call.1} parent=1 // loop_header
      %s21 = sphi 0, %s25
      %p22 = scmp.ge.s32.totalorder %s21, 4
      %s31 = sphi 0, %s33
      %s34 = sphi 0, %s31
      %s35 = sphi 0, %s34
      %s51 = sphi 0, %s35
      %s55 = sphi 0, %s55
      %s57 = sphi 0, %s55
      %s58 = sphi 0, %s57
      %s72 = sphi 0, %s58
      %s76 = sphi 0, %s76
      %s78 = sphi 0, %s76
      %s79 = sphi 0, %s78
      %s93 = sphi 0, %s79
      %s97 = sphi 0, %s97
      %s99 = sphi 0, %s97
      %s100 = sphi 0, %s99
      %s114 = sphi 0, %s100
      %s120 = sphi 0, %s122
      %s123 = sphi 0, %s120
      %s124 = sphi 0, %s123
      %s140 = sphi 0, %s124
      %s144 = sphi 0, %s144
      %s146 = sphi 0, %s144
      %s147 = sphi 0, %s146
      %s161 = sphi 0, %s147
      %s165 = sphi 0, %s165
      %s167 = sphi 0, %s165
      %s168 = sphi 0, %s167
      %s182 = sphi 0, %s168
    $region4: #{tpu_custom_call.1} parent=1 // loop_header_branch
      %24 = sbr.rel (%p22) target = $region8
    $region5: #{tpu_custom_call.1} parent=1 // loop_body
      %s26 = ssub.s32 %s21, 1
      %s27 = ssub.s32 %s21, 2
      %s28 = sadd.s32 %s21, 1
      %s29 = ssub.s32 %s21, %s28
      %p30 = scmp.eq.s32.totalorder %s29, 0
      %s32 = sadd.s32 %s31, 1
      %s33 = scalar_select %p30, %s31, %s32
      %p36 = pneg %p30
      %p37 = scmp.eq.s32.totalorder %s21, 1
      %p38 = por %p36, %p37
      %p39 = scmp.ne.s32.totalorder %s31, %s34
      %p40 = scmp.eq.s32.totalorder %s21, 0
      %p41 = por %p39, %p40
      %p42 = scmp.ne.s32.totalorder %s31, %s34
      %p43 = scmp.eq.s32.totalorder %s26, 1
      %p44 = por %p42, %p43
      %p45 = scmp.ne.s32.totalorder %s34, %s35
      %p46 = scmp.eq.s32.totalorder %s26, 0
      %p47 = por %p45, %p46
      %p48 = scmp.ne.s32.totalorder %s34, %s35
      %p49 = scmp.eq.s32.totalorder %s27, 1
      %p50 = por %p48, %p49
      %p52 = scmp.ne.s32.totalorder %s35, %s51
      %p53 = scmp.eq.s32.totalorder %s27, 0
      %p54 = por %p52, %p53
      %s56 = sadd.s32 %s55, 1
      %p59 = scmp.eq.s32.totalorder %s21, 1
      %p60 = scmp.ne.s32.totalorder %s55, %s57
      %p61 = scmp.eq.s32.totalorder %s21, 0
      %p62 = por %p60, %p61
      %p63 = scmp.ne.s32.totalorder %s55, %s57
      %p64 = scmp.eq.s32.totalorder %s26, 1
      %p65 = por %p63, %p64
      %p66 = scmp.ne.s32.totalorder %s57, %s58
      %p67 = scmp.eq.s32.totalorder %s26, 0
      %p68 = por %p66, %p67
      %p69 = scmp.ne.s32.totalorder %s57, %s58
      %p70 = scmp.eq.s32.totalorder %s27, 1
      %p71 = por %p69, %p70
      %p73 = scmp.ne.s32.totalorder %s58, %s72
      %p74 = scmp.eq.s32.totalorder %s27, 0
      %p75 = por %p73, %p74
      %s77 = sadd.s32 %s76, 1
      %p80 = scmp.eq.s32.totalorder %s21, 1
      %p81 = scmp.ne.s32.totalorder %s76, %s78
      %p82 = scmp.eq.s32.totalorder %s21, 0
      %p83 = por %p81, %p82
      %p84 = scmp.ne.s32.totalorder %s76, %s78
      %p85 = scmp.eq.s32.totalorder %s26, 1
      %p86 = por %p84, %p85
      %p87 = scmp.ne.s32.totalorder %s78, %s79
      %p88 = scmp.eq.s32.totalorder %s26, 0
      %p89 = por %p87, %p88
      %p90 = scmp.ne.s32.totalorder %s78, %s79
      %p91 = scmp.eq.s32.totalorder %s27, 1
      %p92 = por %p90, %p91
      %p94 = scmp.ne.s32.totalorder %s79, %s93
      %p95 = scmp.eq.s32.totalorder %s27, 0
      %p96 = por %p94, %p95
      %s98 = sadd.s32 %s97, 1
      %p101 = scmp.eq.s32.totalorder %s21, 1
      %p102 = scmp.ne.s32.totalorder %s97, %s99
      %p103 = scmp.eq.s32.totalorder %s21, 0
      %p104 = por %p102, %p103
      %p105 = scmp.ne.s32.totalorder %s97, %s99
      %p106 = scmp.eq.s32.totalorder %s26, 1
      %p107 = por %p105, %p106
      %p108 = scmp.ne.s32.totalorder %s99, %s100
      %p109 = scmp.eq.s32.totalorder %s26, 0
      %p110 = por %p108, %p109
      %p111 = scmp.ne.s32.totalorder %s99, %s100
      %p112 = scmp.eq.s32.totalorder %s27, 1
      %p113 = por %p111, %p112
      %p115 = scmp.ne.s32.totalorder %s100, %s114
      %p116 = scmp.eq.s32.totalorder %s27, 0
      %p117 = por %p115, %p116
      %s118 = ssub.s32 %s21, %s28
      %p119 = scmp.eq.s32.totalorder %s118, 0
      %s121 = sadd.s32 %s120, 1
      %s122 = scalar_select %p119, %s120, %s121
      %p125 = pneg %p119
      %p126 = scmp.eq.s32.totalorder %s21, 1
      %p127 = por %p125, %p126
      %p128 = scmp.ne.s32.totalorder %s120, %s123
      %p129 = scmp.eq.s32.totalorder %s21, 0
      %p130 = por %p128, %p129
      %p131 = scmp.ne.s32.totalorder %s120, %s123
      %p132 = scmp.eq.s32.totalorder %s26, 1
      %p133 = por %p131, %p132
      %p134 = scmp.ne.s32.totalorder %s123, %s124
      %p135 = scmp.eq.s32.totalorder %s26, 0
      %p136 = por %p134, %p135
      %p137 = scmp.ne.s32.totalorder %s123, %s124
      %p138 = scmp.eq.s32.totalorder %s27, 1
      %p139 = por %p137, %p138
      %p141 = scmp.ne.s32.totalorder %s124, %s140
      %p142 = scmp.eq.s32.totalorder %s27, 0
      %p143 = por %p141, %p142
      %s145 = sadd.s32 %s144, 1
      %p148 = scmp.eq.s32.totalorder %s21, 1
      %p149 = scmp.ne.s32.totalorder %s144, %s146
      %p150 = scmp.eq.s32.totalorder %s21, 0
      %p151 = por %p149, %p150
      %p152 = scmp.ne.s32.totalorder %s144, %s146
      %p153 = scmp.eq.s32.totalorder %s26, 1
      %p154 = por %p152, %p153
      %p155 = scmp.ne.s32.totalorder %s146, %s147
      %p156 = scmp.eq.s32.totalorder %s26, 0
      %p157 = por %p155, %p156
      %p158 = scmp.ne.s32.totalorder %s146, %s147
      %p159 = scmp.eq.s32.totalorder %s27, 1
      %p160 = por %p158, %p159
      %p162 = scmp.ne.s32.totalorder %s147, %s161
      %p163 = scmp.eq.s32.totalorder %s27, 0
      %p164 = por %p162, %p163
      %s166 = sadd.s32 %s165, 1
      %p169 = scmp.eq.s32.totalorder %s21, 1
      %p170 = scmp.ne.s32.totalorder %s165, %s167
      %p171 = scmp.eq.s32.totalorder %s21, 0
      %p172 = por %p170, %p171
      %p173 = scmp.ne.s32.totalorder %s165, %s167
      %p174 = scmp.eq.s32.totalorder %s26, 1
      %p175 = por %p173, %p174
      %p176 = scmp.ne.s32.totalorder %s167, %s168
      %p177 = scmp.eq.s32.totalorder %s26, 0
      %p178 = por %p176, %p177
      %p179 = scmp.ne.s32.totalorder %s167, %s168
      %p180 = scmp.eq.s32.totalorder %s27, 1
      %p181 = por %p179, %p180
      %p183 = scmp.ne.s32.totalorder %s168, %s182
      %p184 = scmp.eq.s32.totalorder %s27, 0
      %p185 = por %p183, %p184
      %p186 = scmp.le.s32.totalorder 1, %s21
      %p187 = scmp.lt.s32.totalorder %s21, 3
      %p188 = pnand %p186, %p187
      %p189 = pneg %p188
      // Predicated region
      $region9: #{tpu_custom_call.1} parent=5 // pred_check
        _
      $region10: #{tpu_custom_call.1} parent=5 // pred_check_branch
        %191 = sbr.rel (%p188) target = $region12
      $region11: #{tpu_custom_call.1} parent=5 // pred_region
        %s192 = ssub.s32 %s21, 1
        // Predicated region
        $region13: #{tpu_custom_call.1} parent=11 // pred_check
          %p193 = pneg %p68
        $region14: #{tpu_custom_call.1} parent=11 // pred_check_branch
          %195 = sbr.rel (%p193) target = $region16
        $region15: #{tpu_custom_call.1} parent=11 // pred_region
          %s197 = ssub.s32 512, 512
          %198 = vsyncadd [#allocation8], %s197
          %s199 = sshll.u32 [#allocation7], 4
          %s200 = int_to_ptr.vmem [resolvable:$true] %s199
          %205 = dma.hbm_to_vmem [thread:$0]  %s1, 512, %s200, [#allocation8], 128, 128, 8
        $region16: #{tpu_custom_call.1} parent=11 // pred_fallthru
          _
        // Predicated region
        $region17: #{tpu_custom_call.1} parent=11 // pred_check
          %p206 = pneg %p89
        $region18: #{tpu_custom_call.1} parent=11 // pred_check_branch
          %208 = sbr.rel (%p206) target = $region20
        $region19: #{tpu_custom_call.1} parent=11 // pred_region
          %s210 = ssub.s32 128, 128
          %211 = vsyncadd [#allocation8], %s210
          %s213 = sshll.u32 [#allocation9], 4
          %s214 = int_to_ptr.vmem [resolvable:$true] %s213
          %216 = dma.hbm_to_vmem [thread:$0]  %s2, 128, %s214, [#allocation8]
        $region20: #{tpu_custom_call.1} parent=11 // pred_fallthru
          _
        // Predicated region
        $region21: #{tpu_custom_call.1} parent=11 // pred_check
          %p217 = pneg %p110
        $region22: #{tpu_custom_call.1} parent=11 // pred_check_branch
          %219 = sbr.rel (%p217) target = $region24
        $region23: #{tpu_custom_call.1} parent=11 // pred_region
          _
        $region24: #{tpu_custom_call.1} parent=11 // pred_fallthru
          _
      $region12: #{tpu_custom_call.1} parent=5 // pred_fallthru
        _
      %p220 = scmp.lt.s32.totalorder %s21, 2
      // Predicated region
      $region25: #{tpu_custom_call.1} parent=5 // pred_check
        %p221 = pneg %p220
      $region26: #{tpu_custom_call.1} parent=5 // pred_check_branch
        %223 = sbr.rel (%p221) target = $region28
      $region27: #{tpu_custom_call.1} parent=5 // pred_region
        // Predicated region
        $region29: #{tpu_custom_call.1} parent=27 // pred_check
          %p224 = pneg %p41
        $region30: #{tpu_custom_call.1} parent=27 // pred_check_branch
          %226 = sbr.rel (%p224) target = $region32
        $region31: #{tpu_custom_call.1} parent=27 // pred_region
          %s227 = sand.u32 %s31, 1
          %s228 = scalar_lea.sflag [#allocation5], %s227
          %s229 = sand.u32 %s31, 1
          %s230 = smul.addr %s229, 64
          %s231 = scalar_lea.vmem [#allocation4], %s230
          %s232 = smul.u32 8, %s21
          %s234 = ssub.s32 1024, 1024
          %235 = vsyncadd %s228, %s234
          %s236 = smul.addr %s232, 128
          %s237 = scalar_lea.hbm %s0, %s236
          %s238 = sshll.u32 %s231, 4
          %s239 = int_to_ptr.vmem [resolvable:$true] %s238
          %244 = dma.hbm_to_vmem [thread:$0]  %s237, 1024, %s239, %s228, 128, 128, 8
        $region32: #{tpu_custom_call.1} parent=27 // pred_fallthru
          _
      $region28: #{tpu_custom_call.1} parent=5 // pred_fallthru
        _
      %p245 = scmp.le.s32.totalorder 1, %s21
      %p246 = scmp.lt.s32.totalorder %s21, 3
      %p247 = pnand %p245, %p246
      %p248 = pneg %p247
      // Predicated region
      $region33: #{tpu_custom_call.1} parent=5 // pred_check
        _
      $region34: #{tpu_custom_call.1} parent=5 // pred_check_branch
        %250 = sbr.rel (%p247) target = $region36
      $region35: #{tpu_custom_call.1} parent=5 // pred_region
        %s251 = ssub.s32 %s21, 1
        %s252 = sand.u32 %s34, 1
        %s253 = scalar_lea.sflag [#allocation5], %s252
        %s254 = sand.u32 %s34, 1
        %s255 = smul.addr %s254, 64
        %s256 = scalar_lea.vmem [#allocation4], %s255
        // Predicated region
        $region37: #{tpu_custom_call.1} parent=35 // pred_check
          %p257 = pneg %p47
        $region38: #{tpu_custom_call.1} parent=35 // pred_check_branch
          %259 = sbr.rel (%p257) target = $region40
        $region39: #{tpu_custom_call.1} parent=35 // pred_region
          %260 = dma.done %s253, 1024
        $region40: #{tpu_custom_call.1} parent=35 // pred_fallthru
          _
        // Predicated region
        $region41: #{tpu_custom_call.1} parent=35 // pred_check
          %p261 = pneg %p68
        $region42: #{tpu_custom_call.1} parent=35 // pred_check_branch
          %263 = sbr.rel (%p261) target = $region44
        $region43: #{tpu_custom_call.1} parent=35 // pred_region
          %264 = dma.done [#allocation8], 512
        $region44: #{tpu_custom_call.1} parent=35 // pred_fallthru
          _
        // Predicated region
        $region45: #{tpu_custom_call.1} parent=35 // pred_check
          %p265 = pneg %p89
        $region46: #{tpu_custom_call.1} parent=35 // pred_check_branch
          %267 = sbr.rel (%p265) target = $region48
        $region47: #{tpu_custom_call.1} parent=35 // pred_region
          %268 = dma.done [#allocation8], 128
        $region48: #{tpu_custom_call.1} parent=35 // pred_fallthru
          _
        %s269 = sand.u32 %s34, 1
        %s270 = scalar_lea.sflag [#allocation5], %s269
        %s271 = sand.u32 %s34, 1
        %s272 = smul.addr %s271, 64
        %s273 = scalar_lea.vmem [#allocation4], %s272
        %p274 = pneg %p47
        %p275 = pneg %p44
        %p276 = pneg %p68
        %p277 = pneg %p65
        %p278 = pneg %p89
        %p279 = pneg %p86
        %p280 = pneg %p110
        %p281 = pneg %p107
        %p282 = pneg %p136
        %p283 = pneg %p133
        %s284 = sand.u32 %s123, 1
        %s285 = scalar_lea.sflag [#allocation6], %s284
        %s286 = sand.u32 %s123, 1
        %s287 = smul.addr %s286, 16
        %s288 = scalar_lea.vmem [#allocation10], %s287
        %p289 = pneg %p157
        %p290 = pneg %p154
        %p291 = pneg %p178
        %p292 = pneg %p175
        %s293 = smul.u32 8, %s26
        %p294 = scmp.eq.s32.totalorder %s26, 0
        // Predicated region
        $region49: #{tpu_custom_call.1} parent=35 // pred_check
          %p295 = pneg %p294
        $region50: #{tpu_custom_call.1} parent=35 // pred_check_branch
          %297 = sbr.rel (%p295) target = $region52
        $region51: #{tpu_custom_call.1} parent=35 // pred_region
          %v298 = vld [vmem:[#allocation9] sm:$0xff]
          %vm299 = vcmask 261120
          %300 = vst.msk [vmem:[#allocation2] sm:$0xff] %vm299, %v298
          %v301 = vld [vmem:[%s3] sm:$0xff]
          %302 = vst.msk [vmem:[#allocation3] sm:$0xff] %vm299, %v301
        $region52: #{tpu_custom_call.1} parent=35 // pred_fallthru
          _
        %v303 = vld [vmem:[#allocation2] sm:$0xff]
        %v304 = vld [vmem:[#allocation3] sm:$0xff]
        %v305 = vld [vmem:[#allocation7] sm:$0xff]
        %v306 = vld [vmem:[#allocation7 + $0x8] sm:$0xff]
        %v307 = vld [vmem:[#allocation7 + $0x10] sm:$0xff]
        %v308 = vld [vmem:[#allocation7 + $0x18] sm:$0xff]
        %v309 = vld [vmem:[%s256] sm:$0xff]
        %vm310 = vcmask 261120
        %v312 = vsel %vm310, %v303, 0
        %314 = vmatprep.subr.mxu0 0.0
        %315 = vmatpush1.msra.mxu0 %v305
        %316 = vmatprep.subr.mxu0 0.0
        %317 = vmatpush1.msra.mxu0 %v306
        %318 = vmatprep.subr.mxu0 0.0
        %319 = vmatpush1.msra.mxu0 %v307
        %320 = vmatprep.subr.mxu0 0.0
        %321 = vmatpush1.msra.mxu0 %v308
        %322 = vmatprep.subr.mxu0 0.0
        %323 = vmatpush1.msra.mxu0 0.0
        %324 = vmatprep.subr.mxu0 0.0
        %325 = vmatpush1.msra.mxu0 0.0
        %326 = vmatprep.subr.mxu0 0.0
        %327 = vmatpush1.msra.mxu0 0.0
        %328 = vmatprep.subr.mxu0 0.0
        %329 = vmatpush1.msra.mxu0 0.0
        %330 = vmatprep.subr.mxu0 0.0
        %331 = vmatpush1.msra.mxu0 0.0
        %332 = vmatprep.subr.mxu0 0.0
        %333 = vmatpush1.msra.mxu0 0.0
        %334 = vmatprep.subr.mxu0 0.0
        %335 = vmatpush1.msra.mxu0 0.0
        %336 = vmatprep.subr.mxu0 0.0
        %337 = vmatpush1.msra.mxu0 0.0
        %338 = vmatprep.subr.mxu0 0.0
        %339 = vmatpush1.msra.mxu0 0.0
        %340 = vmatprep.subr.mxu0 0.0
        %341 = vmatpush1.msra.mxu0 0.0
        %342 = vmatprep.subr.mxu0 0.0
        %343 = vmatpush1.msra.mxu0 0.0
        %344 = vmatprep.subr.mxu0 0.0
        %345 = vmatpush1.msra.mxu0 0.0
        %346 = vmatprep.subr.mxu0 0.0
        %347 = vmatpush1.msra.mxu0 0.0
        %348 = vmatprep.subr.mxu0 0.0
        %349 = vmatpush1.msra.mxu0 0.0
        %350 = vmatprep.subr.mxu0 0.0
        %351 = vmatpush1.msra.mxu0 0.0
        %352 = vmatprep.subr.mxu0 0.0
        %353 = vmatpush1.msra.mxu0 0.0
        %354 = vmatprep.subr.mxu0 0.0
        %355 = vmatpush1.msra.mxu0 0.0
        %356 = vmatprep.subr.mxu0 0.0
        %357 = vmatpush1.msra.mxu0 0.0
        %358 = vmatprep.subr.mxu0 0.0
        %359 = vmatpush1.msra.mxu0 0.0
        %360 = vmatprep.subr.mxu0 0.0
        %361 = vmatpush1.msra.mxu0 0.0
        %362 = vmatprep.subr.mxu0 0.0
        %363 = vmatpush1.msra.mxu0 0.0
        %364 = vmatprep.subr.mxu0 0.0
        %365 = vmatpush1.msra.mxu0 0.0
        %366 = vmatprep.subr.mxu0 0.0
        %367 = vmatpush1.msra.mxu0 0.0
        %368 = vmatprep.subr.mxu0 0.0
        %369 = vmatpush1.msra.mxu0 0.0
        %370 = vmatprep.subr.mxu0 0.0
        %371 = vmatpush1.msra.mxu0 0.0
        %372 = vmatprep.subr.mxu0 0.0
        %373 = vmatpush1.msra.mxu0 0.0
        %374 = vmatprep.subr.mxu0 0.0
        %375 = vmatpush1.msra.mxu0 0.0
        %376 = vmatprep.subr.mxu0 0.0
        %377 = vmatpush1.msra.mxu0 0.0
        %378 = vmatprep.mubr.f32.mxu0 0.0
        %379 = vmatmul.mubr.f32.gmra.mrb[0].mxu0 %v312
        %v380 = vpop.f32.mrb[0].mxu0
        %v381 = vadd.f32 %v309, %v380
        %v382 = vpop.f32.mrb[0].mxu0
        %383 = vdwg.mxu0
        %v384 = vxor.u32 %v381, 2147483648
        %v385 = vmul.f32 %v384, 1.442695
        %v386 = vpow.pop %v385
        %v387 = vadd.f32 %v386, 1.0
        %v388 = vrcp.pop %v387
        %v389 = vmul.f32 1.0, %v388
        %v390 = vtanh.pop %v381
        %v391 = vmul.f32 %v389, %v304
        %393 = vrot.lane.b32.xlu0 %v390, 64
        %v394 = vpop.permute.xlu0 %393
        %v396 = vmul.f32 %v389, %v394
        %398 = vrot.lane.b32.xlu0 %v396, 96
        %v399 = vpop.permute.xlu0 %398
        %v401 = vadd.f32 %v391, %v399
        %v402 = vtanh.pop %v401
        %404 = vrot.lane.b32.xlu0 %v402, 64
        %v405 = vpop.permute.xlu0 %404
        %v407 = vmul.f32 %v389, %v405
        %409 = vrot.lane.b32.xlu0 %v407, 64
        %v410 = vpop.permute.xlu0 %409
        %412 = vst.msk [vmem:[%s288] sm:$0xff] %vm310, %v410
        %v413 = vld [vmem:[#allocation7] sm:$0xff]
        %v414 = vld [vmem:[#allocation7 + $0x8] sm:$0xff]
        %v415 = vld [vmem:[#allocation7 + $0x10] sm:$0xff]
        %v416 = vld [vmem:[#allocation7 + $0x18] sm:$0xff]
        %s417 = scalar_lea.vmem %s256, 8 [#allocation4]
        %v418 = vld [vmem:[%s417] sm:$0xff]
        %v419 = vsel %vm310, %v410, 0
        %421 = vmatprep.subr.mxu0 0.0
        %422 = vmatpush1.msra.mxu0 %v413
        %423 = vmatprep.subr.mxu0 0.0
        %424 = vmatpush1.msra.mxu0 %v414
        %425 = vmatprep.subr.mxu0 0.0
        %426 = vmatpush1.msra.mxu0 %v415
        %427 = vmatprep.subr.mxu0 0.0
        %428 = vmatpush1.msra.mxu0 %v416
        %429 = vmatprep.subr.mxu0 0.0
        %430 = vmatpush1.msra.mxu0 0.0
        %431 = vmatprep.subr.mxu0 0.0
        %432 = vmatpush1.msra.mxu0 0.0
        %433 = vmatprep.subr.mxu0 0.0
        %434 = vmatpush1.msra.mxu0 0.0
        %435 = vmatprep.subr.mxu0 0.0
        %436 = vmatpush1.msra.mxu0 0.0
        %437 = vmatprep.subr.mxu0 0.0
        %438 = vmatpush1.msra.mxu0 0.0
        %439 = vmatprep.subr.mxu0 0.0
        %440 = vmatpush1.msra.mxu0 0.0
        %441 = vmatprep.subr.mxu0 0.0
        %442 = vmatpush1.msra.mxu0 0.0
        %443 = vmatprep.subr.mxu0 0.0
        %444 = vmatpush1.msra.mxu0 0.0
        %445 = vmatprep.subr.mxu0 0.0
        %446 = vmatpush1.msra.mxu0 0.0
        %447 = vmatprep.subr.mxu0 0.0
        %448 = vmatpush1.msra.mxu0 0.0
        %449 = vmatprep.subr.mxu0 0.0
        %450 = vmatpush1.msra.mxu0 0.0
        %451 = vmatprep.subr.mxu0 0.0
        %452 = vmatpush1.msra.mxu0 0.0
        %453 = vmatprep.subr.mxu0 0.0
        %454 = vmatpush1.msra.mxu0 0.0
        %455 = vmatprep.subr.mxu0 0.0
        %456 = vmatpush1.msra.mxu0 0.0
        %457 = vmatprep.subr.mxu0 0.0
        %458 = vmatpush1.msra.mxu0 0.0
        %459 = vmatprep.subr.mxu0 0.0
        %460 = vmatpush1.msra.mxu0 0.0
        %461 = vmatprep.subr.mxu0 0.0
        %462 = vmatpush1.msra.mxu0 0.0
        %463 = vmatprep.subr.mxu0 0.0
        %464 = vmatpush1.msra.mxu0 0.0
        %465 = vmatprep.subr.mxu0 0.0
        %466 = vmatpush1.msra.mxu0 0.0
        %467 = vmatprep.subr.mxu0 0.0
        %468 = vmatpush1.msra.mxu0 0.0
        %469 = vmatprep.subr.mxu0 0.0
        %470 = vmatpush1.msra.mxu0 0.0
        %471 = vmatprep.subr.mxu0 0.0
        %472 = vmatpush1.msra.mxu0 0.0
        %473 = vmatprep.subr.mxu0 0.0
        %474 = vmatpush1.msra.mxu0 0.0
        %475 = vmatprep.subr.mxu0 0.0
        %476 = vmatpush1.msra.mxu0 0.0
        %477 = vmatprep.subr.mxu0 0.0
        %478 = vmatpush1.msra.mxu0 0.0
        %479 = vmatprep.subr.mxu0 0.0
        %480 = vmatpush1.msra.mxu0 0.0
        %481 = vmatprep.subr.mxu0 0.0
        %482 = vmatpush1.msra.mxu0 0.0
        %483 = vmatprep.subr.mxu0 0.0
        %484 = vmatpush1.msra.mxu0 0.0
        %485 = vmatprep.mubr.f32.mxu0 0.0
        %486 = vmatmul.mubr.f32.gmra.mrb[0].mxu0 %v419
        %v487 = vpop.f32.mrb[0].mxu0
        %v488 = vadd.f32 %v418, %v487
        %v489 = vpop.f32.mrb[0].mxu0
        %490 = vdwg.mxu0
        %v491 = vxor.u32 %v488, 2147483648
        %v492 = vmul.f32 %v491, 1.442695
        %v493 = vpow.pop %v492
        %v494 = vadd.f32 %v493, 1.0
        %v495 = vrcp.pop %v494
        %v496 = vmul.f32 1.0, %v495
        %v497 = vtanh.pop %v488
        %v498 = vmul.f32 %v496, %v401
        %500 = vrot.lane.b32.xlu0 %v497, 64
        %v501 = vpop.permute.xlu0 %500
        %v503 = vmul.f32 %v496, %v501
        %505 = vrot.lane.b32.xlu0 %v503, 96
        %v506 = vpop.permute.xlu0 %505
        %v508 = vadd.f32 %v498, %v506
        %v509 = vtanh.pop %v508
        %511 = vrot.lane.b32.xlu0 %v509, 64
        %v512 = vpop.permute.xlu0 %511
        %v514 = vmul.f32 %v496, %v512
        %516 = vrot.lane.b32.xlu0 %v514, 96
        %v517 = vpop.permute.xlu0 %516
        %vm519 = vcmask 523520
        %520 = vst.msk [vmem:[%s288] sm:$0xff] %vm519, %v517
        %v521 = vld [vmem:[#allocation7] sm:$0xff]
        %v522 = vld [vmem:[#allocation7 + $0x8] sm:$0xff]
        %v523 = vld [vmem:[#allocation7 + $0x10] sm:$0xff]
        %v524 = vld [vmem:[#allocation7 + $0x18] sm:$0xff]
        %s525 = scalar_lea.vmem %s256, 16 [#allocation4]
        %v526 = vld [vmem:[%s525] sm:$0xff]
        %527 = vrot.lane.b32.xlu0 %v514, 64
        %v528 = vpop.permute.xlu0 %527
        %v529 = vsel %vm310, %v528, 0
        %531 = vmatprep.subr.mxu0 0.0
        %532 = vmatpush1.msra.mxu0 %v521
        %533 = vmatprep.subr.mxu0 0.0
        %534 = vmatpush1.msra.mxu0 %v522
        %535 = vmatprep.subr.mxu0 0.0
        %536 = vmatpush1.msra.mxu0 %v523
        %537 = vmatprep.subr.mxu0 0.0
        %538 = vmatpush1.msra.mxu0 %v524
        %539 = vmatprep.subr.mxu0 0.0
        %540 = vmatpush1.msra.mxu0 0.0
        %541 = vmatprep.subr.mxu0 0.0
        %542 = vmatpush1.msra.mxu0 0.0
        %543 = vmatprep.subr.mxu0 0.0
        %544 = vmatpush1.msra.mxu0 0.0
        %545 = vmatprep.subr.mxu0 0.0
        %546 = vmatpush1.msra.mxu0 0.0
        %547 = vmatprep.subr.mxu0 0.0
        %548 = vmatpush1.msra.mxu0 0.0
        %549 = vmatprep.subr.mxu0 0.0
        %550 = vmatpush1.msra.mxu0 0.0
        %551 = vmatprep.subr.mxu0 0.0
        %552 = vmatpush1.msra.mxu0 0.0
        %553 = vmatprep.subr.mxu0 0.0
        %554 = vmatpush1.msra.mxu0 0.0
        %555 = vmatprep.subr.mxu0 0.0
        %556 = vmatpush1.msra.mxu0 0.0
        %557 = vmatprep.subr.mxu0 0.0
        %558 = vmatpush1.msra.mxu0 0.0
        %559 = vmatprep.subr.mxu0 0.0
        %560 = vmatpush1.msra.mxu0 0.0
        %561 = vmatprep.subr.mxu0 0.0
        %562 = vmatpush1.msra.mxu0 0.0
        %563 = vmatprep.subr.mxu0 0.0
        %564 = vmatpush1.msra.mxu0 0.0
        %565 = vmatprep.subr.mxu0 0.0
        %566 = vmatpush1.msra.mxu0 0.0
        %567 = vmatprep.subr.mxu0 0.0
        %568 = vmatpush1.msra.mxu0 0.0
        %569 = vmatprep.subr.mxu0 0.0
        %570 = vmatpush1.msra.mxu0 0.0
        %571 = vmatprep.subr.mxu0 0.0
        %572 = vmatpush1.msra.mxu0 0.0
        %573 = vmatprep.subr.mxu0 0.0
        %574 = vmatpush1.msra.mxu0 0.0
        %575 = vmatprep.subr.mxu0 0.0
        %576 = vmatpush1.msra.mxu0 0.0
        %577 = vmatprep.subr.mxu0 0.0
        %578 = vmatpush1.msra.mxu0 0.0
        %579 = vmatprep.subr.mxu0 0.0
        %580 = vmatpush1.msra.mxu0 0.0
        %581 = vmatprep.subr.mxu0 0.0
        %582 = vmatpush1.msra.mxu0 0.0
        %583 = vmatprep.subr.mxu0 0.0
        %584 = vmatpush1.msra.mxu0 0.0
        %585 = vmatprep.subr.mxu0 0.0
        %586 = vmatpush1.msra.mxu0 0.0
        %587 = vmatprep.subr.mxu0 0.0
        %588 = vmatpush1.msra.mxu0 0.0
        %589 = vmatprep.subr.mxu0 0.0
        %590 = vmatpush1.msra.mxu0 0.0
        %591 = vmatprep.subr.mxu0 0.0
        %592 = vmatpush1.msra.mxu0 0.0
        %593 = vmatprep.subr.mxu0 0.0
        %594 = vmatpush1.msra.mxu0 0.0
        %595 = vmatprep.mubr.f32.mxu0 0.0
        %596 = vmatmul.mubr.f32.gmra.mrb[0].mxu0 %v529
        %v597 = vpop.f32.mrb[0].mxu0
        %v598 = vadd.f32 %v526, %v597
        %v599 = vpop.f32.mrb[0].mxu0
        %600 = vdwg.mxu0
        %v601 = vxor.u32 %v598, 2147483648
        %v602 = vmul.f32 %v601, 1.442695
        %v603 = vpow.pop %v602
        %v604 = vadd.f32 %v603, 1.0
        %v605 = vrcp.pop %v604
        %v606 = vmul.f32 1.0, %v605
        %v607 = vtanh.pop %v598
        %v608 = vmul.f32 %v606, %v508
        %610 = vrot.lane.b32.xlu0 %v607, 64
        %v611 = vpop.permute.xlu0 %610
        %v613 = vmul.f32 %v606, %v611
        %615 = vrot.lane.b32.xlu0 %v613, 96
        %v616 = vpop.permute.xlu0 %615
        %v618 = vadd.f32 %v608, %v616
        %v619 = vtanh.pop %v618
        %621 = vrot.lane.b32.xlu0 %v619, 64
        %v622 = vpop.permute.xlu0 %621
        %v624 = vmul.f32 %v606, %v622
        %vm625 = vcmask 785920
        %626 = vst.msk [vmem:[%s288] sm:$0xff] %vm625, %v624
        %v627 = vld [vmem:[#allocation7] sm:$0xff]
        %v628 = vld [vmem:[#allocation7 + $0x8] sm:$0xff]
        %v629 = vld [vmem:[#allocation7 + $0x10] sm:$0xff]
        %v630 = vld [vmem:[#allocation7 + $0x18] sm:$0xff]
        %s631 = scalar_lea.vmem %s256, 24 [#allocation4]
        %v632 = vld [vmem:[%s631] sm:$0xff]
        %634 = vrot.lane.b32.xlu0 %v624, 64
        %v635 = vpop.permute.xlu0 %634
        %v636 = vsel %vm310, %v635, 0
        %638 = vmatprep.subr.mxu0 0.0
        %639 = vmatpush1.msra.mxu0 %v627
        %640 = vmatprep.subr.mxu0 0.0
        %641 = vmatpush1.msra.mxu0 %v628
        %642 = vmatprep.subr.mxu0 0.0
        %643 = vmatpush1.msra.mxu0 %v629
        %644 = vmatprep.subr.mxu0 0.0
        %645 = vmatpush1.msra.mxu0 %v630
        %646 = vmatprep.subr.mxu0 0.0
        %647 = vmatpush1.msra.mxu0 0.0
        %648 = vmatprep.subr.mxu0 0.0
        %649 = vmatpush1.msra.mxu0 0.0
        %650 = vmatprep.subr.mxu0 0.0
        %651 = vmatpush1.msra.mxu0 0.0
        %652 = vmatprep.subr.mxu0 0.0
        %653 = vmatpush1.msra.mxu0 0.0
        %654 = vmatprep.subr.mxu0 0.0
        %655 = vmatpush1.msra.mxu0 0.0
        %656 = vmatprep.subr.mxu0 0.0
        %657 = vmatpush1.msra.mxu0 0.0
        %658 = vmatprep.subr.mxu0 0.0
        %659 = vmatpush1.msra.mxu0 0.0
        %660 = vmatprep.subr.mxu0 0.0
        %661 = vmatpush1.msra.mxu0 0.0
        %662 = vmatprep.subr.mxu0 0.0
        %663 = vmatpush1.msra.mxu0 0.0
        %664 = vmatprep.subr.mxu0 0.0
        %665 = vmatpush1.msra.mxu0 0.0
        %666 = vmatprep.subr.mxu0 0.0
        %667 = vmatpush1.msra.mxu0 0.0
        %668 = vmatprep.subr.mxu0 0.0
        %669 = vmatpush1.msra.mxu0 0.0
        %670 = vmatprep.subr.mxu0 0.0
        %671 = vmatpush1.msra.mxu0 0.0
        %672 = vmatprep.subr.mxu0 0.0
        %673 = vmatpush1.msra.mxu0 0.0
        %674 = vmatprep.subr.mxu0 0.0
        %675 = vmatpush1.msra.mxu0 0.0
        %676 = vmatprep.subr.mxu0 0.0
        %677 = vmatpush1.msra.mxu0 0.0
        %678 = vmatprep.subr.mxu0 0.0
        %679 = vmatpush1.msra.mxu0 0.0
        %680 = vmatprep.subr.mxu0 0.0
        %681 = vmatpush1.msra.mxu0 0.0
        %682 = vmatprep.subr.mxu0 0.0
        %683 = vmatpush1.msra.mxu0 0.0
        %684 = vmatprep.subr.mxu0 0.0
        %685 = vmatpush1.msra.mxu0 0.0
        %686 = vmatprep.subr.mxu0 0.0
        %687 = vmatpush1.msra.mxu0 0.0
        %688 = vmatprep.subr.mxu0 0.0
        %689 = vmatpush1.msra.mxu0 0.0
        %690 = vmatprep.subr.mxu0 0.0
        %691 = vmatpush1.msra.mxu0 0.0
        %692 = vmatprep.subr.mxu0 0.0
        %693 = vmatpush1.msra.mxu0 0.0
        %694 = vmatprep.subr.mxu0 0.0
        %695 = vmatpush1.msra.mxu0 0.0
        %696 = vmatprep.subr.mxu0 0.0
        %697 = vmatpush1.msra.mxu0 0.0
        %698 = vmatprep.subr.mxu0 0.0
        %699 = vmatpush1.msra.mxu0 0.0
        %700 = vmatprep.subr.mxu0 0.0
        %701 = vmatpush1.msra.mxu0 0.0
        %702 = vmatprep.mubr.f32.mxu0 0.0
        %703 = vmatmul.mubr.f32.gmra.mrb[0].mxu0 %v636
        %v704 = vpop.f32.mrb[0].mxu0
        %v705 = vadd.f32 %v632, %v704
        %v706 = vpop.f32.mrb[0].mxu0
        %707 = vdwg.mxu0
        %v708 = vxor.u32 %v705, 2147483648
        %v709 = vmul.f32 %v708, 1.442695
        %v710 = vpow.pop %v709
        %v711 = vadd.f32 %v710, 1.0
        %v712 = vrcp.pop %v711
        %v713 = vmul.f32 1.0, %v712
        %v714 = vtanh.pop %v705
        %v715 = vmul.f32 %v713, %v618
        %717 = vrot.lane.b32.xlu0 %v714, 64
        %v718 = vpop.permute.xlu0 %717
        %v720 = vmul.f32 %v713, %v718
        %722 = vrot.lane.b32.xlu0 %v720, 96
        %v723 = vpop.permute.xlu0 %722
        %v725 = vadd.f32 %v715, %v723
        %v726 = vtanh.pop %v725
        %728 = vrot.lane.b32.xlu0 %v726, 64
        %v729 = vpop.permute.xlu0 %728
        %v731 = vmul.f32 %v713, %v729
        %733 = vrot.lane.b32.xlu0 %v731, 32
        %v734 = vpop.permute.xlu0 %733
        %vm736 = vcmask 1048320
        %737 = vst.msk [vmem:[%s288] sm:$0xff] %vm736, %v734
        %v738 = vld [vmem:[#allocation7] sm:$0xff]
        %v739 = vld [vmem:[#allocation7 + $0x8] sm:$0xff]
        %v740 = vld [vmem:[#allocation7 + $0x10] sm:$0xff]
        %v741 = vld [vmem:[#allocation7 + $0x18] sm:$0xff]
        %s742 = scalar_lea.vmem %s256, 32 [#allocation4]
        %v743 = vld [vmem:[%s742] sm:$0xff]
        %744 = vrot.lane.b32.xlu0 %v731, 64
        %v745 = vpop.permute.xlu0 %744
        %v746 = vsel %vm310, %v745, 0
        %748 = vmatprep.subr.mxu0 0.0
        %749 = vmatpush1.msra.mxu0 %v738
        %750 = vmatprep.subr.mxu0 0.0
        %751 = vmatpush1.msra.mxu0 %v739
        %752 = vmatprep.subr.mxu0 0.0
        %753 = vmatpush1.msra.mxu0 %v740
        %754 = vmatprep.subr.mxu0 0.0
        %755 = vmatpush1.msra.mxu0 %v741
        %756 = vmatprep.subr.mxu0 0.0
        %757 = vmatpush1.msra.mxu0 0.0
        %758 = vmatprep.subr.mxu0 0.0
        %759 = vmatpush1.msra.mxu0 0.0
        %760 = vmatprep.subr.mxu0 0.0
        %761 = vmatpush1.msra.mxu0 0.0
        %762 = vmatprep.subr.mxu0 0.0
        %763 = vmatpush1.msra.mxu0 0.0
        %764 = vmatprep.subr.mxu0 0.0
        %765 = vmatpush1.msra.mxu0 0.0
        %766 = vmatprep.subr.mxu0 0.0
        %767 = vmatpush1.msra.mxu0 0.0
        %768 = vmatprep.subr.mxu0 0.0
        %769 = vmatpush1.msra.mxu0 0.0
        %770 = vmatprep.subr.mxu0 0.0
        %771 = vmatpush1.msra.mxu0 0.0
        %772 = vmatprep.subr.mxu0 0.0
        %773 = vmatpush1.msra.mxu0 0.0
        %774 = vmatprep.subr.mxu0 0.0
        %775 = vmatpush1.msra.mxu0 0.0
        %776 = vmatprep.subr.mxu0 0.0
        %777 = vmatpush1.msra.mxu0 0.0
        %778 = vmatprep.subr.mxu0 0.0
        %779 = vmatpush1.msra.mxu0 0.0
        %780 = vmatprep.subr.mxu0 0.0
        %781 = vmatpush1.msra.mxu0 0.0
        %782 = vmatprep.subr.mxu0 0.0
        %783 = vmatpush1.msra.mxu0 0.0
        %784 = vmatprep.subr.mxu0 0.0
        %785 = vmatpush1.msra.mxu0 0.0
        %786 = vmatprep.subr.mxu0 0.0
        %787 = vmatpush1.msra.mxu0 0.0
        %788 = vmatprep.subr.mxu0 0.0
        %789 = vmatpush1.msra.mxu0 0.0
        %790 = vmatprep.subr.mxu0 0.0
        %791 = vmatpush1.msra.mxu0 0.0
        %792 = vmatprep.subr.mxu0 0.0
        %793 = vmatpush1.msra.mxu0 0.0
        %794 = vmatprep.subr.mxu0 0.0
        %795 = vmatpush1.msra.mxu0 0.0
        %796 = vmatprep.subr.mxu0 0.0
        %797 = vmatpush1.msra.mxu0 0.0
        %798 = vmatprep.subr.mxu0 0.0
        %799 = vmatpush1.msra.mxu0 0.0
        %800 = vmatprep.subr.mxu0 0.0
        %801 = vmatpush1.msra.mxu0 0.0
        %802 = vmatprep.subr.mxu0 0.0
        %803 = vmatpush1.msra.mxu0 0.0
        %804 = vmatprep.subr.mxu0 0.0
        %805 = vmatpush1.msra.mxu0 0.0
        %806 = vmatprep.subr.mxu0 0.0
        %807 = vmatpush1.msra.mxu0 0.0
        %808 = vmatprep.subr.mxu0 0.0
        %809 = vmatpush1.msra.mxu0 0.0
        %810 = vmatprep.subr.mxu0 0.0
        %811 = vmatpush1.msra.mxu0 0.0
        %812 = vmatprep.mubr.f32.mxu0 0.0
        %813 = vmatmul.mubr.f32.gmra.mrb[0].mxu0 %v746
        %v814 = vpop.f32.mrb[0].mxu0
        %v815 = vadd.f32 %v743, %v814
        %v816 = vpop.f32.mrb[0].mxu0
        %817 = vdwg.mxu0
        %v818 = vxor.u32 %v815, 2147483648
        %v819 = vmul.f32 %v818, 1.442695
        %v820 = vpow.pop %v819
        %v821 = vadd.f32 %v820, 1.0
        %v822 = vrcp.pop %v821
        %v823 = vmul.f32 1.0, %v822
        %v824 = vtanh.pop %v815
        %v825 = vmul.f32 %v823, %v725
        %827 = vrot.lane.b32.xlu0 %v824, 64
        %v828 = vpop.permute.xlu0 %827
        %v830 = vmul.f32 %v823, %v828
        %832 = vrot.lane.b32.xlu0 %v830, 96
        %v833 = vpop.permute.xlu0 %832
        %v835 = vadd.f32 %v825, %v833
        %v836 = vtanh.pop %v835
        %838 = vrot.lane.b32.xlu0 %v836, 64
        %v839 = vpop.permute.xlu0 %838
        %v841 = vmul.f32 %v823, %v839
        %843 = vrot.lane.b32.xlu0 %v841, 64
        %v844 = vpop.permute.xlu0 %843
        %846 = vst.msk [vmem:[%s288 + $0x8] sm:$0xff] %vm310, %v844
        %v847 = vld [vmem:[#allocation7] sm:$0xff]
        %v848 = vld [vmem:[#allocation7 + $0x8] sm:$0xff]
        %v849 = vld [vmem:[#allocation7 + $0x10] sm:$0xff]
        %v850 = vld [vmem:[#allocation7 + $0x18] sm:$0xff]
        %s851 = scalar_lea.vmem %s256, 40 [#allocation4]
        %v852 = vld [vmem:[%s851] sm:$0xff]
        %v853 = vsel %vm310, %v844, 0
        %855 = vmatprep.subr.mxu0 0.0
        %856 = vmatpush1.msra.mxu0 %v847
        %857 = vmatprep.subr.mxu0 0.0
        %858 = vmatpush1.msra.mxu0 %v848
        %859 = vmatprep.subr.mxu0 0.0
        %860 = vmatpush1.msra.mxu0 %v849
        %861 = vmatprep.subr.mxu0 0.0
        %862 = vmatpush1.msra.mxu0 %v850
        %863 = vmatprep.subr.mxu0 0.0
        %864 = vmatpush1.msra.mxu0 0.0
        %865 = vmatprep.subr.mxu0 0.0
        %866 = vmatpush1.msra.mxu0 0.0
        %867 = vmatprep.subr.mxu0 0.0
        %868 = vmatpush1.msra.mxu0 0.0
        %869 = vmatprep.subr.mxu0 0.0
        %870 = vmatpush1.msra.mxu0 0.0
        %871 = vmatprep.subr.mxu0 0.0
        %872 = vmatpush1.msra.mxu0 0.0
        %873 = vmatprep.subr.mxu0 0.0
        %874 = vmatpush1.msra.mxu0 0.0
        %875 = vmatprep.subr.mxu0 0.0
        %876 = vmatpush1.msra.mxu0 0.0
        %877 = vmatprep.subr.mxu0 0.0
        %878 = vmatpush1.msra.mxu0 0.0
        %879 = vmatprep.subr.mxu0 0.0
        %880 = vmatpush1.msra.mxu0 0.0
        %881 = vmatprep.subr.mxu0 0.0
        %882 = vmatpush1.msra.mxu0 0.0
        %883 = vmatprep.subr.mxu0 0.0
        %884 = vmatpush1.msra.mxu0 0.0
        %885 = vmatprep.subr.mxu0 0.0
        %886 = vmatpush1.msra.mxu0 0.0
        %887 = vmatprep.subr.mxu0 0.0
        %888 = vmatpush1.msra.mxu0 0.0
        %889 = vmatprep.subr.mxu0 0.0
        %890 = vmatpush1.msra.mxu0 0.0
        %891 = vmatprep.subr.mxu0 0.0
        %892 = vmatpush1.msra.mxu0 0.0
        %893 = vmatprep.subr.mxu0 0.0
        %894 = vmatpush1.msra.mxu0 0.0
        %895 = vmatprep.subr.mxu0 0.0
        %896 = vmatpush1.msra.mxu0 0.0
        %897 = vmatprep.subr.mxu0 0.0
        %898 = vmatpush1.msra.mxu0 0.0
        %899 = vmatprep.subr.mxu0 0.0
        %900 = vmatpush1.msra.mxu0 0.0
        %901 = vmatprep.subr.mxu0 0.0
        %902 = vmatpush1.msra.mxu0 0.0
        %903 = vmatprep.subr.mxu0 0.0
        %904 = vmatpush1.msra.mxu0 0.0
        %905 = vmatprep.subr.mxu0 0.0
        %906 = vmatpush1.msra.mxu0 0.0
        %907 = vmatprep.subr.mxu0 0.0
        %908 = vmatpush1.msra.mxu0 0.0
        %909 = vmatprep.subr.mxu0 0.0
        %910 = vmatpush1.msra.mxu0 0.0
        %911 = vmatprep.subr.mxu0 0.0
        %912 = vmatpush1.msra.mxu0 0.0
        %913 = vmatprep.subr.mxu0 0.0
        %914 = vmatpush1.msra.mxu0 0.0
        %915 = vmatprep.subr.mxu0 0.0
        %916 = vmatpush1.msra.mxu0 0.0
        %917 = vmatprep.subr.mxu0 0.0
        %918 = vmatpush1.msra.mxu0 0.0
        %919 = vmatprep.mubr.f32.mxu0 0.0
        %920 = vmatmul.mubr.f32.gmra.mrb[0].mxu0 %v853
        %v921 = vpop.f32.mrb[0].mxu0
        %v922 = vadd.f32 %v852, %v921
        %v923 = vpop.f32.mrb[0].mxu0
        %924 = vdwg.mxu0
        %v925 = vxor.u32 %v922, 2147483648
        %v926 = vmul.f32 %v925, 1.442695
        %v927 = vpow.pop %v926
        %v928 = vadd.f32 %v927, 1.0
        %v929 = vrcp.pop %v928
        %v930 = vmul.f32 1.0, %v929
        %v931 = vtanh.pop %v922
        %v932 = vmul.f32 %v930, %v835
        %934 = vrot.lane.b32.xlu0 %v931, 64
        %v935 = vpop.permute.xlu0 %934
        %v937 = vmul.f32 %v930, %v935
        %939 = vrot.lane.b32.xlu0 %v937, 96
        %v940 = vpop.permute.xlu0 %939
        %v942 = vadd.f32 %v932, %v940
        %v943 = vtanh.pop %v942
        %945 = vrot.lane.b32.xlu0 %v943, 64
        %v946 = vpop.permute.xlu0 %945
        %v948 = vmul.f32 %v930, %v946
        %950 = vrot.lane.b32.xlu0 %v948, 96
        %v951 = vpop.permute.xlu0 %950
        %953 = vst.msk [vmem:[%s288 + $0x8] sm:$0xff] %vm519, %v951
        %v954 = vld [vmem:[#allocation7] sm:$0xff]
        %v955 = vld [vmem:[#allocation7 + $0x8] sm:$0xff]
        %v956 = vld [vmem:[#allocation7 + $0x10] sm:$0xff]
        %v957 = vld [vmem:[#allocation7 + $0x18] sm:$0xff]
        %s958 = scalar_lea.vmem %s256, 48 [#allocation4]
        %v959 = vld [vmem:[%s958] sm:$0xff]
        %960 = vrot.lane.b32.xlu0 %v948, 64
        %v961 = vpop.permute.xlu0 %960
        %v962 = vsel %vm310, %v961, 0
        %964 = vmatprep.subr.mxu0 0.0
        %965 = vmatpush1.msra.mxu0 %v954
        %966 = vmatprep.subr.mxu0 0.0
        %967 = vmatpush1.msra.mxu0 %v955
        %968 = vmatprep.subr.mxu0 0.0
        %969 = vmatpush1.msra.mxu0 %v956
        %970 = vmatprep.subr.mxu0 0.0
        %971 = vmatpush1.msra.mxu0 %v957
        %972 = vmatprep.subr.mxu0 0.0
        %973 = vmatpush1.msra.mxu0 0.0
        %974 = vmatprep.subr.mxu0 0.0
        %975 = vmatpush1.msra.mxu0 0.0
        %976 = vmatprep.subr.mxu0 0.0
        %977 = vmatpush1.msra.mxu0 0.0
        %978 = vmatprep.subr.mxu0 0.0
        %979 = vmatpush1.msra.mxu0 0.0
        %980 = vmatprep.subr.mxu0 0.0
        %981 = vmatpush1.msra.mxu0 0.0
        %982 = vmatprep.subr.mxu0 0.0
        %983 = vmatpush1.msra.mxu0 0.0
        %984 = vmatprep.subr.mxu0 0.0
        %985 = vmatpush1.msra.mxu0 0.0
        %986 = vmatprep.subr.mxu0 0.0
        %987 = vmatpush1.msra.mxu0 0.0
        %988 = vmatprep.subr.mxu0 0.0
        %989 = vmatpush1.msra.mxu0 0.0
        %990 = vmatprep.subr.mxu0 0.0
        %991 = vmatpush1.msra.mxu0 0.0
        %992 = vmatprep.subr.mxu0 0.0
        %993 = vmatpush1.msra.mxu0 0.0
        %994 = vmatprep.subr.mxu0 0.0
        %995 = vmatpush1.msra.mxu0 0.0
        %996 = vmatprep.subr.mxu0 0.0
        %997 = vmatpush1.msra.mxu0 0.0
        %998 = vmatprep.subr.mxu0 0.0
        %999 = vmatpush1.msra.mxu0 0.0
        %1000 = vmatprep.subr.mxu0 0.0
        %1001 = vmatpush1.msra.mxu0 0.0
        %1002 = vmatprep.subr.mxu0 0.0
        %1003 = vmatpush1.msra.mxu0 0.0
        %1004 = vmatprep.subr.mxu0 0.0
        %1005 = vmatpush1.msra.mxu0 0.0
        %1006 = vmatprep.subr.mxu0 0.0
        %1007 = vmatpush1.msra.mxu0 0.0
        %1008 = vmatprep.subr.mxu0 0.0
        %1009 = vmatpush1.msra.mxu0 0.0
        %1010 = vmatprep.subr.mxu0 0.0
        %1011 = vmatpush1.msra.mxu0 0.0
        %1012 = vmatprep.subr.mxu0 0.0
        %1013 = vmatpush1.msra.mxu0 0.0
        %1014 = vmatprep.subr.mxu0 0.0
        %1015 = vmatpush1.msra.mxu0 0.0
        %1016 = vmatprep.subr.mxu0 0.0
        %1017 = vmatpush1.msra.mxu0 0.0
        %1018 = vmatprep.subr.mxu0 0.0
        %1019 = vmatpush1.msra.mxu0 0.0
        %1020 = vmatprep.subr.mxu0 0.0
        %1021 = vmatpush1.msra.mxu0 0.0
        %1022 = vmatprep.subr.mxu0 0.0
        %1023 = vmatpush1.msra.mxu0 0.0
        %1024 = vmatprep.subr.mxu0 0.0
        %1025 = vmatpush1.msra.mxu0 0.0
        %1026 = vmatprep.subr.mxu0 0.0
        %1027 = vmatpush1.msra.mxu0 0.0
        %1028 = vmatprep.mubr.f32.mxu0 0.0
        %1029 = vmatmul.mubr.f32.gmra.mrb[0].mxu0 %v962
        %v1030 = vpop.f32.mrb[0].mxu0
        %v1031 = vadd.f32 %v959, %v1030
        %v1032 = vpop.f32.mrb[0].mxu0
        %1033 = vdwg.mxu0
        %v1034 = vxor.u32 %v1031, 2147483648
        %v1035 = vmul.f32 %v1034, 1.442695
        %v1036 = vpow.pop %v1035
        %v1037 = vadd.f32 %v1036, 1.0
        %v1038 = vrcp.pop %v1037
        %v1039 = vmul.f32 1.0, %v1038
        %v1040 = vtanh.pop %v1031
        %v1041 = vmul.f32 %v1039, %v942
        %1043 = vrot.lane.b32.xlu0 %v1040, 64
        %v1044 = vpop.permute.xlu0 %1043
        %v1046 = vmul.f32 %v1039, %v1044
        %1048 = vrot.lane.b32.xlu0 %v1046, 96
        %v1049 = vpop.permute.xlu0 %1048
        %v1051 = vadd.f32 %v1041, %v1049
        %v1052 = vtanh.pop %v1051
        %1054 = vrot.lane.b32.xlu0 %v1052, 64
        %v1055 = vpop.permute.xlu0 %1054
        %v1057 = vmul.f32 %v1039, %v1055
        %1058 = vst.msk [vmem:[%s288 + $0x8] sm:$0xff] %vm625, %v1057
        %v1059 = vld [vmem:[#allocation7] sm:$0xff]
        %v1060 = vld [vmem:[#allocation7 + $0x8] sm:$0xff]
        %v1061 = vld [vmem:[#allocation7 + $0x10] sm:$0xff]
        %v1062 = vld [vmem:[#allocation7 + $0x18] sm:$0xff]
        %s1063 = scalar_lea.vmem %s256, 56 [#allocation4]
        %v1064 = vld [vmem:[%s1063] sm:$0xff]
        %1066 = vrot.lane.b32.xlu0 %v1057, 64
        %v1067 = vpop.permute.xlu0 %1066
        %v1068 = vsel %vm310, %v1067, 0
        %1070 = vmatprep.subr.mxu0 0.0
        %1071 = vmatpush1.msra.mxu0 %v1059
        %1072 = vmatprep.subr.mxu0 0.0
        %1073 = vmatpush1.msra.mxu0 %v1060
        %1074 = vmatprep.subr.mxu0 0.0
        %1075 = vmatpush1.msra.mxu0 %v1061
        %1076 = vmatprep.subr.mxu0 0.0
        %1077 = vmatpush1.msra.mxu0 %v1062
        %1078 = vmatprep.subr.mxu0 0.0
        %1079 = vmatpush1.msra.mxu0 0.0
        %1080 = vmatprep.subr.mxu0 0.0
        %1081 = vmatpush1.msra.mxu0 0.0
        %1082 = vmatprep.subr.mxu0 0.0
        %1083 = vmatpush1.msra.mxu0 0.0
        %1084 = vmatprep.subr.mxu0 0.0
        %1085 = vmatpush1.msra.mxu0 0.0
        %1086 = vmatprep.subr.mxu0 0.0
        %1087 = vmatpush1.msra.mxu0 0.0
        %1088 = vmatprep.subr.mxu0 0.0
        %1089 = vmatpush1.msra.mxu0 0.0
        %1090 = vmatprep.subr.mxu0 0.0
        %1091 = vmatpush1.msra.mxu0 0.0
        %1092 = vmatprep.subr.mxu0 0.0
        %1093 = vmatpush1.msra.mxu0 0.0
        %1094 = vmatprep.subr.mxu0 0.0
        %1095 = vmatpush1.msra.mxu0 0.0
        %1096 = vmatprep.subr.mxu0 0.0
        %1097 = vmatpush1.msra.mxu0 0.0
        %1098 = vmatprep.subr.mxu0 0.0
        %1099 = vmatpush1.msra.mxu0 0.0
        %1100 = vmatprep.subr.mxu0 0.0
        %1101 = vmatpush1.msra.mxu0 0.0
        %1102 = vmatprep.subr.mxu0 0.0
        %1103 = vmatpush1.msra.mxu0 0.0
        %1104 = vmatprep.subr.mxu0 0.0
        %1105 = vmatpush1.msra.mxu0 0.0
        %1106 = vmatprep.subr.mxu0 0.0
        %1107 = vmatpush1.msra.mxu0 0.0
        %1108 = vmatprep.subr.mxu0 0.0
        %1109 = vmatpush1.msra.mxu0 0.0
        %1110 = vmatprep.subr.mxu0 0.0
        %1111 = vmatpush1.msra.mxu0 0.0
        %1112 = vmatprep.subr.mxu0 0.0
        %1113 = vmatpush1.msra.mxu0 0.0
        %1114 = vmatprep.subr.mxu0 0.0
        %1115 = vmatpush1.msra.mxu0 0.0
        %1116 = vmatprep.subr.mxu0 0.0
        %1117 = vmatpush1.msra.mxu0 0.0
        %1118 = vmatprep.subr.mxu0 0.0
        %1119 = vmatpush1.msra.mxu0 0.0
        %1120 = vmatprep.subr.mxu0 0.0
        %1121 = vmatpush1.msra.mxu0 0.0
        %1122 = vmatprep.subr.mxu0 0.0
        %1123 = vmatpush1.msra.mxu0 0.0
        %1124 = vmatprep.subr.mxu0 0.0
        %1125 = vmatpush1.msra.mxu0 0.0
        %1126 = vmatprep.subr.mxu0 0.0
        %1127 = vmatpush1.msra.mxu0 0.0
        %1128 = vmatprep.subr.mxu0 0.0
        %1129 = vmatpush1.msra.mxu0 0.0
        %1130 = vmatprep.subr.mxu0 0.0
        %1131 = vmatpush1.msra.mxu0 0.0
        %1132 = vmatprep.subr.mxu0 0.0
        %1133 = vmatpush1.msra.mxu0 0.0
        %1134 = vmatprep.mubr.f32.mxu0 0.0
        %1135 = vmatmul.mubr.f32.gmra.mrb[0].mxu0 %v1068
        %v1136 = vpop.f32.mrb[0].mxu0
        %v1137 = vadd.f32 %v1064, %v1136
        %v1138 = vpop.f32.mrb[0].mxu0
        %1139 = vdwg.mxu0
        %v1140 = vxor.u32 %v1137, 2147483648
        %v1141 = vmul.f32 %v1140, 1.442695
        %v1142 = vpow.pop %v1141
        %v1143 = vadd.f32 %v1142, 1.0
        %v1144 = vrcp.pop %v1143
        %v1145 = vmul.f32 1.0, %v1144
        %v1146 = vtanh.pop %v1137
        %v1147 = vmul.f32 %v1145, %v1051
        %1149 = vrot.lane.b32.xlu0 %v1146, 64
        %v1150 = vpop.permute.xlu0 %1149
        %v1152 = vmul.f32 %v1145, %v1150
        %1154 = vrot.lane.b32.xlu0 %v1152, 96
        %v1155 = vpop.permute.xlu0 %1154
        %v1157 = vadd.f32 %v1147, %v1155
        %v1158 = vtanh.pop %v1157
        %1160 = vrot.lane.b32.xlu0 %v1158, 64
        %v1161 = vpop.permute.xlu0 %1160
        %v1163 = vmul.f32 %v1145, %v1161
        %1165 = vrot.lane.b32.xlu0 %v1163, 32
        %v1166 = vpop.permute.xlu0 %1165
        %1168 = vst.msk [vmem:[%s288 + $0x8] sm:$0xff] %vm736, %v1166
        %1169 = vrot.lane.b32.xlu0 %v1163, 64
        %v1170 = vpop.permute.xlu0 %1169
        %1172 = vst.msk [vmem:[#allocation2] sm:$0xff] %vm310, %v1170
        %1173 = vst.msk [vmem:[#allocation3] sm:$0xff] %vm310, %v1157
        %p1174 = scmp.eq.s32.totalorder %s26, 1
        // Predicated region
        $region53: #{tpu_custom_call.1} parent=35 // pred_check
          %p1175 = pneg %p1174
        $region54: #{tpu_custom_call.1} parent=35 // pred_check_branch
          %1177 = sbr.rel (%p1175) target = $region56
        $region55: #{tpu_custom_call.1} parent=35 // pred_region
          %1178 = vst.msk [vmem:[#allocation11] sm:$0xff] %vm310, %v1170
          %1179 = vst.msk [vmem:[#allocation13] sm:$0xff] %vm310, %v1157
        $region56: #{tpu_custom_call.1} parent=35 // pred_fallthru
          _
        %s1180 = sand.u32 %s123, 1
        %s1181 = scalar_lea.sflag [#allocation6], %s1180
        %s1182 = sand.u32 %s123, 1
        %s1183 = smul.addr %s1182, 16
        %s1184 = scalar_lea.vmem [#allocation10], %s1183
        // Predicated region
        $region57: #{tpu_custom_call.1} parent=35 // pred_check
          %p1185 = pneg %p133
        $region58: #{tpu_custom_call.1} parent=35 // pred_check_branch
          %1187 = sbr.rel (%p1185) target = $region60
        $region59: #{tpu_custom_call.1} parent=35 // pred_region
          %s1189 = ssub.s32 256, 256
          %1190 = vsyncadd %s1181, %s1189
          %s1191 = smul.addr %s26, 2
          %s1192 = smul.addr %s1191, 128
          %s1193 = scalar_lea.hbm %s4, %s1192
          %s1195 = sshll.u32 %s1184, 4
          %s1196 = int_to_ptr.vmem [resolvable:$true] %s1195
          %1198 = dma.vmem_to_hbm [thread:$0]  %s1196, 256, %s1193, %s1181
        $region60: #{tpu_custom_call.1} parent=35 // pred_fallthru
          _
        // Predicated region
        $region61: #{tpu_custom_call.1} parent=35 // pred_check
          %p1199 = pneg %p154
        $region62: #{tpu_custom_call.1} parent=35 // pred_check_branch
          %1201 = sbr.rel (%p1199) target = $region64
        $region63: #{tpu_custom_call.1} parent=35 // pred_region
          %s1203 = ssub.s32 128, 128
          %1204 = vsyncadd [#allocation12], %s1203
          %s1206 = sshll.u32 [#allocation11], 4
          %s1207 = int_to_ptr.vmem [resolvable:$true] %s1206
          %1209 = dma.vmem_to_hbm [thread:$0]  %s1207, 128, %s5, [#allocation12]
        $region64: #{tpu_custom_call.1} parent=35 // pred_fallthru
          _
        // Predicated region
        $region65: #{tpu_custom_call.1} parent=35 // pred_check
          %p1210 = pneg %p175
        $region66: #{tpu_custom_call.1} parent=35 // pred_check_branch
          %1212 = sbr.rel (%p1210) target = $region68
        $region67: #{tpu_custom_call.1} parent=35 // pred_region
          %s1214 = ssub.s32 128, 128
          %1215 = vsyncadd [#allocation12], %s1214
          %s1217 = sshll.u32 [#allocation13], 4
          %s1218 = int_to_ptr.vmem [resolvable:$true] %s1217
          %1220 = dma.vmem_to_hbm [thread:$0]  %s1218, 128, %s6, [#allocation12]
        $region68: #{tpu_custom_call.1} parent=35 // pred_fallthru
          _
        // Predicated region
        $region69: #{tpu_custom_call.1} parent=35 // pred_check
          %p1221 = pneg %p154
        $region70: #{tpu_custom_call.1} parent=35 // pred_check_branch
          %1223 = sbr.rel (%p1221) target = $region72
        $region71: #{tpu_custom_call.1} parent=35 // pred_region
          %1224 = dma.done [#allocation12], 128
        $region72: #{tpu_custom_call.1} parent=35 // pred_fallthru
          _
        // Predicated region
        $region73: #{tpu_custom_call.1} parent=35 // pred_check
          %p1225 = pneg %p175
        $region74: #{tpu_custom_call.1} parent=35 // pred_check_branch
          %1227 = sbr.rel (%p1225) target = $region76
        $region75: #{tpu_custom_call.1} parent=35 // pred_region
          %1228 = dma.done [#allocation12], 128
        $region76: #{tpu_custom_call.1} parent=35 // pred_fallthru
          _
      $region36: #{tpu_custom_call.1} parent=5 // pred_fallthru
        _
      %p1229 = scmp.le.s32.totalorder 2, %s21
      // Predicated region
      $region77: #{tpu_custom_call.1} parent=5 // pred_check
        %p1230 = pneg %p1229
      $region78: #{tpu_custom_call.1} parent=5 // pred_check_branch
        %1232 = sbr.rel (%p1230) target = $region80
      $region79: #{tpu_custom_call.1} parent=5 // pred_region
        %s1233 = ssub.s32 %s21, 2
        // Predicated region
        $region81: #{tpu_custom_call.1} parent=79 // pred_check
          %p1234 = pneg %p139
        $region82: #{tpu_custom_call.1} parent=79 // pred_check_branch
          %1236 = sbr.rel (%p1234) target = $region84
        $region83: #{tpu_custom_call.1} parent=79 // pred_region
          %s1237 = sand.u32 %s124, 1
          %s1238 = scalar_lea.sflag [#allocation6], %s1237
          %s1239 = sand.u32 %s124, 1
          %s1240 = smul.addr %s1239, 16
          %s1241 = scalar_lea.vmem [#allocation10], %s1240
          %1242 = dma.done %s1238, 256
        $region84: #{tpu_custom_call.1} parent=79 // pred_fallthru
          _
      $region80: #{tpu_custom_call.1} parent=5 // pred_fallthru
        _
    $region6: #{tpu_custom_call.1} parent=1 // loop_footer
      %s25 = sadd.s32 1, %s21
    $region7: #{tpu_custom_call.1} parent=1 // loop_footer_branch
      %20 = sbr.rel target = $region3
    $region8: #{tpu_custom_call.1} parent=1 // loop_exit
      _
    %1243 = vsyncpa [#allocation5], 1
    %s1244 = scalar_lea.sflag [#allocation5], 1
    %1245 = vsyncpa %s1244, 1
    %1246 = vsyncpa [#allocation8], 1
    %1247 = vsyncpa [#allocation6], 1
    %s1248 = scalar_lea.sflag [#allocation6], 1
    %1249 = vsyncpa %s1248, 1
    %1250 = vsyncpa [#allocation12], 1

</llo_original>
